<compile_context>
chip_gen: v7x
topology: tpu7x:2x2x1
jax: 0.10.0
libtpu: 0.0.40
codegen_flags: <defaults>
</compile_context>

<pallas_src>
import functools

import jax
import jax.numpy as jnp
from jax.experimental import pallas as pl
from jax.experimental.pallas import tpu as pltpu

# ----------------------------- config -------------------------------------
CFG = dict(
    embedding_dim=32,
    context_length=8,
    heads=4,
    dropout_rate=0.0,
    qkv_bias=False,
)
EPS = 1e-5


# ----------------------------- kernel helpers ------------------------------
def _layernorm(v, gamma, beta):
    mean = jnp.mean(v, axis=-1, keepdims=True)
    var = jnp.mean((v - mean) ** 2, axis=-1, keepdims=True)  # unbiased=False (torch-style)
    return (v - mean) * jax.lax.rsqrt(var + EPS) * gamma + beta


def _gelu_tanh(x):
    # tanh-approximation GELU (matches the custom GELU of the reference model)
    return 0.5 * x * (1.0 + jnp.tanh(jnp.sqrt(2.0 / jnp.pi) * (x + 0.044715 * x * x * x)))


# ----------------------------- kernel -------------------------------------
def transformer_kernel(
    x_ref,            # (N, D)   rows handled in this grid step (N = B*T or T)
    mask_ref,         # (N, N)   additive attention bias: 0 allowed / -1e30 masked
    g1_ref, s1_ref,   # (1, D)   LayerNorm1 scale / shift
    wqkv_ref,         # (D, 3D)  fused [Wq | Wk | Wv]
    wo_ref, bo_ref,   # (D, D), (1, D)
    g2_ref, s2_ref,   # (1, D)   LayerNorm2 scale / shift
    w1_ref, b1_ref,   # (D, 4D), (1, 4D)
    w2_ref, b2_ref,   # (4D, D), (1, D)
    o_ref,            # (N, D)
    *, heads, head_dim,
):
    x = x_ref[...]                                 # (N, D)
    D = heads * head_dim
    inv_sqrt_hd = 1.0 / jnp.sqrt(jnp.float32(head_dim))

    # ---- block 1: LN1 -> MHA -> residual ----
    h = _layernorm(x, g1_ref[0], s1_ref[0])

    # single fused QKV matmul: (N, D) @ (D, 3D) -> (N, 3D)
    qkv = jnp.dot(h, wqkv_ref[...], preferred_element_type=jnp.float32)
    bias = mask_ref[...]                           # (N, N) additive mask

    # Short unrolled head loop (heads=4) over the full row tile; batch separation is handled
    # by the block-diagonal additive mask, so both batch elements share each matmul.
    # Each head's context is folded straight into the output projection via the matching
    # sublane-slice of Wo (avoids the lane-axis concatenate of per-head contexts).
    attn = jnp.zeros_like(x)                       # (N, D) f32 accumulator
    for hh in range(heads):
        lo = hh * head_dim
        qh = qkv[:, lo:lo + head_dim]              # (N, hd)
        kh = qkv[:, D + lo:D + lo + head_dim]
        vh = qkv[:, 2 * D + lo:2 * D + lo + head_dim]
        s = jnp.dot(qh, kh.T, preferred_element_type=jnp.float32) * inv_sqrt_hd + bias
        s = s - jnp.max(s, axis=-1, keepdims=True)
        p = jnp.exp(s)
        p = p * pl.reciprocal(jnp.sum(p, axis=-1, keepdims=True), approx=True)
        ctx_h = jnp.dot(p, vh, preferred_element_type=jnp.float32)        # (N, hd)
        attn = attn + jnp.dot(ctx_h, wo_ref[lo:lo + head_dim, :],
                              preferred_element_type=jnp.float32)         # (N, D)
    attn = attn + bo_ref[0]
    x1 = x + attn                                  # residual 1

    # ---- block 2: LN2 -> FeedForward -> residual ----
    h2 = _layernorm(x1, g2_ref[0], s2_ref[0])
    f = jnp.dot(h2, w1_ref[...], preferred_element_type=jnp.float32) + b1_ref[0]
    f = _gelu_tanh(f)
    f = jnp.dot(f, w2_ref[...], preferred_element_type=jnp.float32) + b2_ref[0]

    o_ref[...] = x1 + f


# ----------------------------- wrapper -------------------------------------
def transformer_block(x, params, cfg, *, batch_parallel=False):
    """batch_parallel=False (default): single grid step over all B*T rows (best on v5e/v6e).
       batch_parallel=True: grid=(B,) with "parallel" semantics, one batch element per
       TensorCore (use on v7x, which has 2 TCs per chip)."""
    B, T, D = x.shape
    heads = cfg["heads"]
    head_dim = D // heads
    Dff = 4 * D
    N = B * T

    # Flatten batch*seq in the wrapper (free in XLA) -> lane/sublane dense 2D activations.
    x2 = x.reshape(N, D)
    # Fuse Q/K/V projection weights into one (D, 3D) matrix.
    wqkv = jnp.concatenate([params["wq"], params["wk"], params["wv"]], axis=1)

    # Precompute the additive attention bias (causal + same-sequence block-diagonal).
    rows = T if batch_parallel else N
    r = jnp.arange(rows)[:, None]
    c = jnp.arange(rows)[None, :]
    allowed = (c <= r) & ((r // T) == (c // T))
    attn_bias = jnp.where(allowed, 0.0, -1e30).astype(jnp.float32)

    kernel = functools.partial(transformer_kernel, heads=heads, head_dim=head_dim)

    full = lambda shape: pl.BlockSpec(shape, lambda b: (0,) * len(shape))
    if batch_parallel:
        grid = (B,)
        x_spec = pl.BlockSpec((T, D), lambda b: (b, 0))
        dims = ("parallel",)
    else:
        grid = (1,)
        x_spec = pl.BlockSpec((N, D), lambda b: (0, 0))
        dims = ("arbitrary",)

    in_specs = [
        x_spec,                                   # x rows
        full((rows, rows)),                       # attention bias
        full((1, D)), full((1, D)),               # LN1 scale/shift
        full((D, 3 * D)),                         # fused Wqkv
        full((D, D)), full((1, D)),               # Wo, bo
        full((1, D)), full((1, D)),               # LN2 scale/shift
        full((D, Dff)), full((1, Dff)),           # FF W1, b1
        full((Dff, D)), full((1, D)),             # FF W2, b2
    ]

    out2 = pl.pallas_call(
        kernel,
        out_shape=jax.ShapeDtypeStruct((N, D), jnp.float32),
        grid_spec=pltpu.PrefetchScalarGridSpec(
            num_scalar_prefetch=0,
            grid=grid,
            in_specs=in_specs,
            out_specs=x_spec,
        ),
        compiler_params=pltpu.CompilerParams(dimension_semantics=dims),
    )(
        x2, attn_bias,
        params["ln1_g"], params["ln1_s"],
        wqkv,
        params["wo"], params["bo"],
        params["ln2_g"], params["ln2_s"],
        params["w1"], params["b1"],
        params["w2"], params["b2"],
    )
    return out2.reshape(B, T, D)


# ----------------------------- pure-JAX reference ---------------------------
def transformer_ref(x, p, cfg):
    heads = cfg["heads"]
    B, T, D = x.shape
    hd = D // heads

    def ln(v, g, s):
        m = jnp.mean(v, axis=-1, keepdims=True)
        var = jnp.mean((v - m) ** 2, axis=-1, keepdims=True)
        return (v - m) / jnp.sqrt(var + EPS) * g + s

    h = ln(x, p["ln1_g"][0], p["ln1_s"][0])
    q = h @ p["wq"]
    k = h @ p["wk"]
    v = h @ p["wv"]
    q = q.reshape(B, T, heads, hd).transpose(0, 2, 1, 3)
    k = k.reshape(B, T, heads, hd).transpose(0, 2, 1, 3)
    v = v.reshape(B, T, heads, hd).transpose(0, 2, 1, 3)
    scores = jnp.einsum("bhqd,bhkd->bhqk", q, k) / jnp.sqrt(hd)
    mask = jnp.tril(jnp.ones((T, T), bool))
    scores = jnp.where(mask, scores, -jnp.inf)
    w = jax.nn.softmax(scores, axis=-1)
    ctx = jnp.einsum("bhqk,bhkd->bhqd", w, v).transpose(0, 2, 1, 3).reshape(B, T, D)
    x1 = x + (ctx @ p["wo"] + p["bo"][0])

    h2 = ln(x1, p["ln2_g"][0], p["ln2_s"][0])
    f = h2 @ p["w1"] + p["b1"][0]
    f = 0.5 * f * (1.0 + jnp.tanh(jnp.sqrt(2.0 / jnp.pi) * (f + 0.044715 * f ** 3)))
    f = f @ p["w2"] + p["b2"][0]
    return x1 + f


# ----------------------------- main -----------------------------------------
if __name__ == "__main__":
    cfg = CFG
    B, T, D = 2, cfg["context_length"], cfg["embedding_dim"]
    Dff = 4 * D

    key = jax.random.PRNGKey(0)
    ks = jax.random.split(key, 10)

    scale = 0.05
    params = {
        "ln1_g": jnp.ones((1, D), jnp.float32),
        "ln1_s": jnp.zeros((1, D), jnp.float32),
        "wq": scale * jax.random.normal(ks[0], (D, D), jnp.float32),
        "wk": scale * jax.random.normal(ks[1], (D, D), jnp.float32),
        "wv": scale * jax.random.normal(ks[2], (D, D), jnp.float32),
        "wo": scale * jax.random.normal(ks[3], (D, D), jnp.float32),
        "bo": scale * jax.random.normal(ks[4], (1, D), jnp.float32),
        "ln2_g": jnp.ones((1, D), jnp.float32),
        "ln2_s": jnp.zeros((1, D), jnp.float32),
        "w1": scale * jax.random.normal(ks[5], (D, Dff), jnp.float32),
        "b1": scale * jax.random.normal(ks[6], (1, Dff), jnp.float32),
        "w2": scale * jax.random.normal(ks[7], (Dff, D), jnp.float32),
        "b2": scale * jax.random.normal(ks[8], (1, D), jnp.float32),
    }

    x = jax.random.normal(ks[9], (B, T, D), jnp.float32)

    ref = transformer_ref(x, params, cfg)

    # Tolerance slightly looser than bit-exact because the softmax denominator uses the
    # EUP approximate reciprocal (pl.reciprocal(..., approx=True)).
    ATOL = RTOL = 1e-3

    # Default path: collapsed grid (single step over all B*T rows) — best on v5e/v6e.
    out = jax.block_until_ready(transformer_block(x, params, cfg))
    assert out.shape == (B, T, D)
    assert jnp.allclose(out, ref, atol=ATOL, rtol=RTOL), "mismatch vs JAX reference (collapsed grid)"

    # v7x-style path: grid=(B,) parallel so each TensorCore takes one batch element.
    out_p = jax.block_until_ready(transformer_block(x, params, cfg, batch_parallel=True))
    assert jnp.allclose(out_p, ref, atol=ATOL, rtol=RTOL), "mismatch vs JAX reference (parallel grid)"

    print("KERNEL_OK")
</pallas_src>

<mosaic_0001>
module attributes {stable_mosaic.version = 11 : i64} {
  func.func @transformer_kernel(%arg0: i32, %arg1: memref<16x32xf32, #tpu.memory_space<vmem>>, %arg2: memref<16x16xf32, #tpu.memory_space<vmem>>, %arg3: memref<1x32xf32, #tpu.memory_space<vmem>>, %arg4: memref<1x32xf32, #tpu.memory_space<vmem>>, %arg5: memref<32x96xf32, #tpu.memory_space<vmem>>, %arg6: memref<32x32xf32, #tpu.memory_space<vmem>>, %arg7: memref<1x32xf32, #tpu.memory_space<vmem>>, %arg8: memref<1x32xf32, #tpu.memory_space<vmem>>, %arg9: memref<1x32xf32, #tpu.memory_space<vmem>>, %arg10: memref<32x128xf32, #tpu.memory_space<vmem>>, %arg11: memref<1x128xf32, #tpu.memory_space<vmem>>, %arg12: memref<128x32xf32, #tpu.memory_space<vmem>>, %arg13: memref<1x32xf32, #tpu.memory_space<vmem>>, %arg14: memref<16x32xf32, #tpu.memory_space<vmem>>) attributes {dimension_semantics = [#tpu.dimension_semantics<arbitrary>], iteration_bounds = array<i64: 1>, scalar_prefetch = 0 : i64, scratch_operands = 0 : i64, tpu.core_type = #tpu.core_type<tc>, window_params = [{pipeline_mode = #tpu.pipeline_mode<synchronous>, transform_indices = @transform_0, window_bounds = array<i64: 16, 32>}, {pipeline_mode = #tpu.pipeline_mode<synchronous>, transform_indices = @transform_1, window_bounds = array<i64: 16, 16>}, {pipeline_mode = #tpu.pipeline_mode<synchronous>, transform_indices = @transform_2, window_bounds = array<i64: 1, 32>}, {pipeline_mode = #tpu.pipeline_mode<synchronous>, transform_indices = @transform_3, window_bounds = array<i64: 1, 32>}, {pipeline_mode = #tpu.pipeline_mode<synchronous>, transform_indices = @transform_4, window_bounds = array<i64: 32, 96>}, {pipeline_mode = #tpu.pipeline_mode<synchronous>, transform_indices = @transform_5, window_bounds = array<i64: 32, 32>}, {pipeline_mode = #tpu.pipeline_mode<synchronous>, transform_indices = @transform_6, window_bounds = array<i64: 1, 32>}, {pipeline_mode = #tpu.pipeline_mode<synchronous>, transform_indices = @transform_7, window_bounds = array<i64: 1, 32>}, {pipeline_mode = #tpu.pipeline_mode<synchronous>, transform_indices = @transform_8, window_bounds = array<i64: 1, 32>}, {pipeline_mode = #tpu.pipeline_mode<synchronous>, transform_indices = @transform_9, window_bounds = array<i64: 32, 128>}, {pipeline_mode = #tpu.pipeline_mode<synchronous>, transform_indices = @transform_10, window_bounds = array<i64: 1, 128>}, {pipeline_mode = #tpu.pipeline_mode<synchronous>, transform_indices = @transform_11, window_bounds = array<i64: 128, 32>}, {pipeline_mode = #tpu.pipeline_mode<synchronous>, transform_indices = @transform_12, window_bounds = array<i64: 1, 32>}, {pipeline_mode = #tpu.pipeline_mode<synchronous>, transform_indices = @transform_13, window_bounds = array<i64: 16, 32>}]} {
    %c0 = arith.constant 0 : index
    %c0_0 = arith.constant 0 : index
    %0 = vector.load %arg1[%c0, %c0_0] : memref<16x32xf32, #tpu.memory_space<vmem>>, vector<16x32xf32>
    %cst = arith.constant 8.000000e+00 : f32
    %1 = math.sqrt %cst : f32
    %cst_1 = arith.constant 1.000000e+00 : f32
    %2 = arith.divf %cst_1, %1 : f32
    %c0_2 = arith.constant 0 : index
    %c0_3 = arith.constant 0 : index
    %3 = vector.load %arg3[%c0_2, %c0_3] : memref<1x32xf32, #tpu.memory_space<vmem>>, vector<1x32xf32>
    %4 = vector.shape_cast %3 : vector<1x32xf32> to vector<32xf32>
    %c0_4 = arith.constant 0 : index
    %c0_5 = arith.constant 0 : index
    %5 = vector.load %arg4[%c0_4, %c0_5] : memref<1x32xf32, #tpu.memory_space<vmem>>, vector<1x32xf32>
    %6 = vector.shape_cast %5 : vector<1x32xf32> to vector<32xf32>
    %cst_6 = arith.constant dense<0.000000e+00> : vector<16xf32>
    %7 = vector.multi_reduction <add>, %0, %cst_6 [1] : vector<16x32xf32> to vector<16xf32>
    %8 = vector.shape_cast %7 : vector<16xf32> to vector<16x1xf32>
    %cst_7 = arith.constant 3.200000e+01 : f32
    %9 = vector.broadcast %cst_7 : f32 to vector<16x1xf32>
    %10 = arith.divf %8, %9 : vector<16x1xf32>
    %11 = vector.broadcast %10 : vector<16x1xf32> to vector<16x32xf32>
    %12 = arith.subf %0, %11 : vector<16x32xf32>
    %13 = arith.mulf %12, %12 : vector<16x32xf32>
    %cst_8 = arith.constant dense<0.000000e+00> : vector<16xf32>
    %14 = vector.multi_reduction <add>, %13, %cst_8 [1] : vector<16x32xf32> to vector<16xf32>
    %15 = vector.shape_cast %14 : vector<16xf32> to vector<16x1xf32>
    %cst_9 = arith.constant 3.200000e+01 : f32
    %16 = vector.broadcast %cst_9 : f32 to vector<16x1xf32>
    %17 = arith.divf %15, %16 : vector<16x1xf32>
    %18 = vector.broadcast %10 : vector<16x1xf32> to vector<16x32xf32>
    %19 = arith.subf %0, %18 : vector<16x32xf32>
    %cst_10 = arith.constant 9.99999974E-6 : f32
    %20 = vector.broadcast %cst_10 : f32 to vector<16x1xf32>
    %21 = arith.addf %17, %20 : vector<16x1xf32>
    %22 = math.rsqrt %21 : vector<16x1xf32>
    %23 = vector.broadcast %22 : vector<16x1xf32> to vector<16x32xf32>
    %24 = arith.mulf %19, %23 : vector<16x32xf32>
    %25 = vector.shape_cast %4 : vector<32xf32> to vector<1x32xf32>
    %26 = vector.broadcast %25 : vector<1x32xf32> to vector<16x32xf32>
    %27 = arith.mulf %24, %26 : vector<16x32xf32>
    %28 = vector.shape_cast %6 : vector<32xf32> to vector<1x32xf32>
    %29 = vector.broadcast %28 : vector<1x32xf32> to vector<16x32xf32>
    %30 = arith.addf %27, %29 : vector<16x32xf32>
    %c0_11 = arith.constant 0 : index
    %c0_12 = arith.constant 0 : index
    %31 = vector.load %arg5[%c0_11, %c0_12] : memref<32x96xf32, #tpu.memory_space<vmem>>, vector<32x96xf32>
    %cst_13 = arith.constant dense<0.000000e+00> : vector<16x96xf32>
    %32 = tpu.matmul %30, %31, %cst_13 {dimension_numbers = #tpu.dot_dimension_numbers<[1], [0], [0], [1], [0, 0, 1, 1], [], []>} : vector<16x32xf32>, vector<32x96xf32>, vector<16x96xf32> -> vector<16x96xf32>
    %c0_14 = arith.constant 0 : index
    %c0_15 = arith.constant 0 : index
    %33 = vector.load %arg2[%c0_14, %c0_15] : memref<16x16xf32, #tpu.memory_space<vmem>>, vector<16x16xf32>
    %cst_16 = arith.constant 0.000000e+00 : f32
    %34 = vector.broadcast %cst_16 : f32 to vector<16x32xf32>
    %35 = vector.extract_strided_slice %32 {offsets = [0, 0], sizes = [16, 8], strides = [1, 1]} : vector<16x96xf32> to vector<16x8xf32>
    %36 = vector.extract_strided_slice %32 {offsets = [0, 32], sizes = [16, 8], strides = [1, 1]} : vector<16x96xf32> to vector<16x8xf32>
    %37 = vector.extract_strided_slice %32 {offsets = [0, 64], sizes = [16, 8], strides = [1, 1]} : vector<16x96xf32> to vector<16x8xf32>
    %38 = tpu.transpose %36, [1, 0] : vector<16x8xf32> -> vector<8x16xf32>
    %cst_17 = arith.constant dense<0.000000e+00> : vector<16x16xf32>
    %39 = tpu.matmul %35, %38, %cst_17 {dimension_numbers = #tpu.dot_dimension_numbers<[1], [0], [0], [1], [0, 0, 1, 1], [], []>} : vector<16x8xf32>, vector<8x16xf32>, vector<16x16xf32> -> vector<16x16xf32>
    %40 = vector.broadcast %2 : f32 to vector<16x16xf32>
    %41 = arith.mulf %39, %40 : vector<16x16xf32>
    %42 = arith.addf %41, %33 : vector<16x16xf32>
    %cst_18 = arith.constant dense<0xFF800000> : vector<16xf32>
    %43 = vector.multi_reduction <maximumf>, %42, %cst_18 [1] : vector<16x16xf32> to vector<16xf32>
    %44 = vector.shape_cast %43 : vector<16xf32> to vector<16x1xf32>
    %45 = vector.broadcast %44 : vector<16x1xf32> to vector<16x16xf32>
    %46 = arith.subf %42, %45 : vector<16x16xf32>
    %47 = math.exp %46 : vector<16x16xf32>
    %cst_19 = arith.constant dense<0.000000e+00> : vector<16xf32>
    %48 = vector.multi_reduction <add>, %47, %cst_19 [1] : vector<16x16xf32> to vector<16xf32>
    %49 = vector.shape_cast %48 : vector<16xf32> to vector<16x1xf32>
    %50 = tpu.reciprocal %49 {approx = true} : vector<16x1xf32> -> vector<16x1xf32>
    %51 = vector.broadcast %50 : vector<16x1xf32> to vector<16x16xf32>
    %52 = arith.mulf %47, %51 : vector<16x16xf32>
    %cst_20 = arith.constant dense<0.000000e+00> : vector<16x8xf32>
    %53 = tpu.matmul %52, %37, %cst_20 {dimension_numbers = #tpu.dot_dimension_numbers<[1], [0], [0], [1], [0, 0, 1, 1], [], []>} : vector<16x16xf32>, vector<16x8xf32>, vector<16x8xf32> -> vector<16x8xf32>
    %c0_21 = arith.constant 0 : index
    %c0_22 = arith.constant 0 : index
    %54 = vector.load %arg6[%c0_21, %c0_22] : memref<32x32xf32, #tpu.memory_space<vmem>>, vector<8x32xf32>
    %cst_23 = arith.constant dense<0.000000e+00> : vector<16x32xf32>
    %55 = tpu.matmul %53, %54, %cst_23 {dimension_numbers = #tpu.dot_dimension_numbers<[1], [0], [0], [1], [0, 0, 1, 1], [], []>} : vector<16x8xf32>, vector<8x32xf32>, vector<16x32xf32> -> vector<16x32xf32>
    %56 = arith.addf %34, %55 : vector<16x32xf32>
    %57 = vector.extract_strided_slice %32 {offsets = [0, 8], sizes = [16, 8], strides = [1, 1]} : vector<16x96xf32> to vector<16x8xf32>
    %58 = vector.extract_strided_slice %32 {offsets = [0, 40], sizes = [16, 8], strides = [1, 1]} : vector<16x96xf32> to vector<16x8xf32>
    %59 = vector.extract_strided_slice %32 {offsets = [0, 72], sizes = [16, 8], strides = [1, 1]} : vector<16x96xf32> to vector<16x8xf32>
    %60 = tpu.transpose %58, [1, 0] : vector<16x8xf32> -> vector<8x16xf32>
    %cst_24 = arith.constant dense<0.000000e+00> : vector<16x16xf32>
    %61 = tpu.matmul %57, %60, %cst_24 {dimension_numbers = #tpu.dot_dimension_numbers<[1], [0], [0], [1], [0, 0, 1, 1], [], []>} : vector<16x8xf32>, vector<8x16xf32>, vector<16x16xf32> -> vector<16x16xf32>
    %62 = vector.broadcast %2 : f32 to vector<16x16xf32>
    %63 = arith.mulf %61, %62 : vector<16x16xf32>
    %64 = arith.addf %63, %33 : vector<16x16xf32>
    %cst_25 = arith.constant dense<0xFF800000> : vector<16xf32>
    %65 = vector.multi_reduction <maximumf>, %64, %cst_25 [1] : vector<16x16xf32> to vector<16xf32>
    %66 = vector.shape_cast %65 : vector<16xf32> to vector<16x1xf32>
    %67 = vector.broadcast %66 : vector<16x1xf32> to vector<16x16xf32>
    %68 = arith.subf %64, %67 : vector<16x16xf32>
    %69 = math.exp %68 : vector<16x16xf32>
    %cst_26 = arith.constant dense<0.000000e+00> : vector<16xf32>
    %70 = vector.multi_reduction <add>, %69, %cst_26 [1] : vector<16x16xf32> to vector<16xf32>
    %71 = vector.shape_cast %70 : vector<16xf32> to vector<16x1xf32>
    %72 = tpu.reciprocal %71 {approx = true} : vector<16x1xf32> -> vector<16x1xf32>
    %73 = vector.broadcast %72 : vector<16x1xf32> to vector<16x16xf32>
    %74 = arith.mulf %69, %73 : vector<16x16xf32>
    %cst_27 = arith.constant dense<0.000000e+00> : vector<16x8xf32>
    %75 = tpu.matmul %74, %59, %cst_27 {dimension_numbers = #tpu.dot_dimension_numbers<[1], [0], [0], [1], [0, 0, 1, 1], [], []>} : vector<16x16xf32>, vector<16x8xf32>, vector<16x8xf32> -> vector<16x8xf32>
    %c8 = arith.constant 8 : index
    %c0_28 = arith.constant 0 : index
    %76 = vector.load %arg6[%c8, %c0_28] : memref<32x32xf32, #tpu.memory_space<vmem>>, vector<8x32xf32>
    %cst_29 = arith.constant dense<0.000000e+00> : vector<16x32xf32>
    %77 = tpu.matmul %75, %76, %cst_29 {dimension_numbers = #tpu.dot_dimension_numbers<[1], [0], [0], [1], [0, 0, 1, 1], [], []>} : vector<16x8xf32>, vector<8x32xf32>, vector<16x32xf32> -> vector<16x32xf32>
    %78 = arith.addf %56, %77 : vector<16x32xf32>
    %79 = vector.extract_strided_slice %32 {offsets = [0, 16], sizes = [16, 8], strides = [1, 1]} : vector<16x96xf32> to vector<16x8xf32>
    %80 = vector.extract_strided_slice %32 {offsets = [0, 48], sizes = [16, 8], strides = [1, 1]} : vector<16x96xf32> to vector<16x8xf32>
    %81 = vector.extract_strided_slice %32 {offsets = [0, 80], sizes = [16, 8], strides = [1, 1]} : vector<16x96xf32> to vector<16x8xf32>
    %82 = tpu.transpose %80, [1, 0] : vector<16x8xf32> -> vector<8x16xf32>
    %cst_30 = arith.constant dense<0.000000e+00> : vector<16x16xf32>
    %83 = tpu.matmul %79, %82, %cst_30 {dimension_numbers = #tpu.dot_dimension_numbers<[1], [0], [0], [1], [0, 0, 1, 1], [], []>} : vector<16x8xf32>, vector<8x16xf32>, vector<16x16xf32> -> vector<16x16xf32>
    %84 = vector.broadcast %2 : f32 to vector<16x16xf32>
    %85 = arith.mulf %83, %84 : vector<16x16xf32>
    %86 = arith.addf %85, %33 : vector<16x16xf32>
    %cst_31 = arith.constant dense<0xFF800000> : vector<16xf32>
    %87 = vector.multi_reduction <maximumf>, %86, %cst_31 [1] : vector<16x16xf32> to vector<16xf32>
    %88 = vector.shape_cast %87 : vector<16xf32> to vector<16x1xf32>
    %89 = vector.broadcast %88 : vector<16x1xf32> to vector<16x16xf32>
    %90 = arith.subf %86, %89 : vector<16x16xf32>
    %91 = math.exp %90 : vector<16x16xf32>
    %cst_32 = arith.constant dense<0.000000e+00> : vector<16xf32>
    %92 = vector.multi_reduction <add>, %91, %cst_32 [1] : vector<16x16xf32> to vector<16xf32>
    %93 = vector.shape_cast %92 : vector<16xf32> to vector<16x1xf32>
    %94 = tpu.reciprocal %93 {approx = true} : vector<16x1xf32> -> vector<16x1xf32>
    %95 = vector.broadcast %94 : vector<16x1xf32> to vector<16x16xf32>
    %96 = arith.mulf %91, %95 : vector<16x16xf32>
    %cst_33 = arith.constant dense<0.000000e+00> : vector<16x8xf32>
    %97 = tpu.matmul %96, %81, %cst_33 {dimension_numbers = #tpu.dot_dimension_numbers<[1], [0], [0], [1], [0, 0, 1, 1], [], []>} : vector<16x16xf32>, vector<16x8xf32>, vector<16x8xf32> -> vector<16x8xf32>
    %c16 = arith.constant 16 : index
    %c0_34 = arith.constant 0 : index
    %98 = vector.load %arg6[%c16, %c0_34] : memref<32x32xf32, #tpu.memory_space<vmem>>, vector<8x32xf32>
    %cst_35 = arith.constant dense<0.000000e+00> : vector<16x32xf32>
    %99 = tpu.matmul %97, %98, %cst_35 {dimension_numbers = #tpu.dot_dimension_numbers<[1], [0], [0], [1], [0, 0, 1, 1], [], []>} : vector<16x8xf32>, vector<8x32xf32>, vector<16x32xf32> -> vector<16x32xf32>
    %100 = arith.addf %78, %99 : vector<16x32xf32>
    %101 = vector.extract_strided_slice %32 {offsets = [0, 24], sizes = [16, 8], strides = [1, 1]} : vector<16x96xf32> to vector<16x8xf32>
    %102 = vector.extract_strided_slice %32 {offsets = [0, 56], sizes = [16, 8], strides = [1, 1]} : vector<16x96xf32> to vector<16x8xf32>
    %103 = vector.extract_strided_slice %32 {offsets = [0, 88], sizes = [16, 8], strides = [1, 1]} : vector<16x96xf32> to vector<16x8xf32>
    %104 = tpu.transpose %102, [1, 0] : vector<16x8xf32> -> vector<8x16xf32>
    %cst_36 = arith.constant dense<0.000000e+00> : vector<16x16xf32>
    %105 = tpu.matmul %101, %104, %cst_36 {dimension_numbers = #tpu.dot_dimension_numbers<[1], [0], [0], [1], [0, 0, 1, 1], [], []>} : vector<16x8xf32>, vector<8x16xf32>, vector<16x16xf32> -> vector<16x16xf32>
    %106 = vector.broadcast %2 : f32 to vector<16x16xf32>
    %107 = arith.mulf %105, %106 : vector<16x16xf32>
    %108 = arith.addf %107, %33 : vector<16x16xf32>
    %cst_37 = arith.constant dense<0xFF800000> : vector<16xf32>
    %109 = vector.multi_reduction <maximumf>, %108, %cst_37 [1] : vector<16x16xf32> to vector<16xf32>
    %110 = vector.shape_cast %109 : vector<16xf32> to vector<16x1xf32>
    %111 = vector.broadcast %110 : vector<16x1xf32> to vector<16x16xf32>
    %112 = arith.subf %108, %111 : vector<16x16xf32>
    %113 = math.exp %112 : vector<16x16xf32>
    %cst_38 = arith.constant dense<0.000000e+00> : vector<16xf32>
    %114 = vector.multi_reduction <add>, %113, %cst_38 [1] : vector<16x16xf32> to vector<16xf32>
    %115 = vector.shape_cast %114 : vector<16xf32> to vector<16x1xf32>
    %116 = tpu.reciprocal %115 {approx = true} : vector<16x1xf32> -> vector<16x1xf32>
    %117 = vector.broadcast %116 : vector<16x1xf32> to vector<16x16xf32>
    %118 = arith.mulf %113, %117 : vector<16x16xf32>
    %cst_39 = arith.constant dense<0.000000e+00> : vector<16x8xf32>
    %119 = tpu.matmul %118, %103, %cst_39 {dimension_numbers = #tpu.dot_dimension_numbers<[1], [0], [0], [1], [0, 0, 1, 1], [], []>} : vector<16x16xf32>, vector<16x8xf32>, vector<16x8xf32> -> vector<16x8xf32>
    %c24 = arith.constant 24 : index
    %c0_40 = arith.constant 0 : index
    %120 = vector.load %arg6[%c24, %c0_40] : memref<32x32xf32, #tpu.memory_space<vmem>>, vector<8x32xf32>
    %cst_41 = arith.constant dense<0.000000e+00> : vector<16x32xf32>
    %121 = tpu.matmul %119, %120, %cst_41 {dimension_numbers = #tpu.dot_dimension_numbers<[1], [0], [0], [1], [0, 0, 1, 1], [], []>} : vector<16x8xf32>, vector<8x32xf32>, vector<16x32xf32> -> vector<16x32xf32>
    %122 = arith.addf %100, %121 : vector<16x32xf32>
    %c0_42 = arith.constant 0 : index
    %c0_43 = arith.constant 0 : index
    %123 = vector.load %arg7[%c0_42, %c0_43] : memref<1x32xf32, #tpu.memory_space<vmem>>, vector<1x32xf32>
    %124 = vector.shape_cast %123 : vector<1x32xf32> to vector<32xf32>
    %125 = vector.shape_cast %124 : vector<32xf32> to vector<1x32xf32>
    %126 = vector.broadcast %125 : vector<1x32xf32> to vector<16x32xf32>
    %127 = arith.addf %122, %126 : vector<16x32xf32>
    %128 = arith.addf %0, %127 : vector<16x32xf32>
    %c0_44 = arith.constant 0 : index
    %c0_45 = arith.constant 0 : index
    %129 = vector.load %arg8[%c0_44, %c0_45] : memref<1x32xf32, #tpu.memory_space<vmem>>, vector<1x32xf32>
    %130 = vector.shape_cast %129 : vector<1x32xf32> to vector<32xf32>
    %c0_46 = arith.constant 0 : index
    %c0_47 = arith.constant 0 : index
    %131 = vector.load %arg9[%c0_46, %c0_47] : memref<1x32xf32, #tpu.memory_space<vmem>>, vector<1x32xf32>
    %132 = vector.shape_cast %131 : vector<1x32xf32> to vector<32xf32>
    %cst_48 = arith.constant dense<0.000000e+00> : vector<16xf32>
    %133 = vector.multi_reduction <add>, %128, %cst_48 [1] : vector<16x32xf32> to vector<16xf32>
    %134 = vector.shape_cast %133 : vector<16xf32> to vector<16x1xf32>
    %cst_49 = arith.constant 3.200000e+01 : f32
    %135 = vector.broadcast %cst_49 : f32 to vector<16x1xf32>
    %136 = arith.divf %134, %135 : vector<16x1xf32>
    %137 = vector.broadcast %136 : vector<16x1xf32> to vector<16x32xf32>
    %138 = arith.subf %128, %137 : vector<16x32xf32>
    %139 = arith.mulf %138, %138 : vector<16x32xf32>
    %cst_50 = arith.constant dense<0.000000e+00> : vector<16xf32>
    %140 = vector.multi_reduction <add>, %139, %cst_50 [1] : vector<16x32xf32> to vector<16xf32>
    %141 = vector.shape_cast %140 : vector<16xf32> to vector<16x1xf32>
    %cst_51 = arith.constant 3.200000e+01 : f32
    %142 = vector.broadcast %cst_51 : f32 to vector<16x1xf32>
    %143 = arith.divf %141, %142 : vector<16x1xf32>
    %144 = vector.broadcast %136 : vector<16x1xf32> to vector<16x32xf32>
    %145 = arith.subf %128, %144 : vector<16x32xf32>
    %cst_52 = arith.constant 9.99999974E-6 : f32
    %146 = vector.broadcast %cst_52 : f32 to vector<16x1xf32>
    %147 = arith.addf %143, %146 : vector<16x1xf32>
    %148 = math.rsqrt %147 : vector<16x1xf32>
    %149 = vector.broadcast %148 : vector<16x1xf32> to vector<16x32xf32>
    %150 = arith.mulf %145, %149 : vector<16x32xf32>
    %151 = vector.shape_cast %130 : vector<32xf32> to vector<1x32xf32>
    %152 = vector.broadcast %151 : vector<1x32xf32> to vector<16x32xf32>
    %153 = arith.mulf %150, %152 : vector<16x32xf32>
    %154 = vector.shape_cast %132 : vector<32xf32> to vector<1x32xf32>
    %155 = vector.broadcast %154 : vector<1x32xf32> to vector<16x32xf32>
    %156 = arith.addf %153, %155 : vector<16x32xf32>
    %c0_53 = arith.constant 0 : index
    %c0_54 = arith.constant 0 : index
    %157 = vector.load %arg10[%c0_53, %c0_54] : memref<32x128xf32, #tpu.memory_space<vmem>>, vector<32x128xf32>
    %cst_55 = arith.constant dense<0.000000e+00> : vector<16x128xf32>
    %158 = tpu.matmul %156, %157, %cst_55 {dimension_numbers = #tpu.dot_dimension_numbers<[1], [0], [0], [1], [0, 0, 1, 1], [], []>} : vector<16x32xf32>, vector<32x128xf32>, vector<16x128xf32> -> vector<16x128xf32>
    %c0_56 = arith.constant 0 : index
    %c0_57 = arith.constant 0 : index
    %159 = vector.load %arg11[%c0_56, %c0_57] : memref<1x128xf32, #tpu.memory_space<vmem>>, vector<1x128xf32>
    %160 = vector.shape_cast %159 : vector<1x128xf32> to vector<128xf32>
    %161 = vector.shape_cast %160 : vector<128xf32> to vector<1x128xf32>
    %162 = vector.broadcast %161 : vector<1x128xf32> to vector<16x128xf32>
    %163 = arith.addf %158, %162 : vector<16x128xf32>
    %cst_58 = arith.constant 5.000000e-01 : f32
    %164 = vector.broadcast %cst_58 : f32 to vector<16x128xf32>
    %165 = arith.mulf %164, %163 : vector<16x128xf32>
    %cst_59 = arith.constant 0.636619746 : f32
    %166 = math.sqrt %cst_59 : f32
    %cst_60 = arith.constant 4.471500e-02 : f32
    %167 = vector.broadcast %cst_60 : f32 to vector<16x128xf32>
    %168 = arith.mulf %167, %163 : vector<16x128xf32>
    %169 = arith.mulf %168, %163 : vector<16x128xf32>
    %170 = arith.mulf %169, %163 : vector<16x128xf32>
    %171 = arith.addf %163, %170 : vector<16x128xf32>
    %172 = vector.broadcast %166 : f32 to vector<16x128xf32>
    %173 = arith.mulf %172, %171 : vector<16x128xf32>
    %174 = math.tanh %173 : vector<16x128xf32>
    %cst_61 = arith.constant 1.000000e+00 : f32
    %175 = vector.broadcast %cst_61 : f32 to vector<16x128xf32>
    %176 = arith.addf %175, %174 : vector<16x128xf32>
    %177 = arith.mulf %165, %176 : vector<16x128xf32>
    %c0_62 = arith.constant 0 : index
    %c0_63 = arith.constant 0 : index
    %178 = vector.load %arg12[%c0_62, %c0_63] : memref<128x32xf32, #tpu.memory_space<vmem>>, vector<128x32xf32>
    %cst_64 = arith.constant dense<0.000000e+00> : vector<16x32xf32>
    %179 = tpu.matmul %177, %178, %cst_64 {dimension_numbers = #tpu.dot_dimension_numbers<[1], [0], [0], [1], [0, 0, 1, 1], [], []>} : vector<16x128xf32>, vector<128x32xf32>, vector<16x32xf32> -> vector<16x32xf32>
    %c0_65 = arith.constant 0 : index
    %c0_66 = arith.constant 0 : index
    %180 = vector.load %arg13[%c0_65, %c0_66] : memref<1x32xf32, #tpu.memory_space<vmem>>, vector<1x32xf32>
    %181 = vector.shape_cast %180 : vector<1x32xf32> to vector<32xf32>
    %182 = vector.shape_cast %181 : vector<32xf32> to vector<1x32xf32>
    %183 = vector.broadcast %182 : vector<1x32xf32> to vector<16x32xf32>
    %184 = arith.addf %179, %183 : vector<16x32xf32>
    %185 = arith.addf %128, %184 : vector<16x32xf32>
    %c0_67 = arith.constant 0 : index
    %c0_68 = arith.constant 0 : index
    %186 = vector.load %arg14[%c0_67, %c0_68] : memref<16x32xf32, #tpu.memory_space<vmem>>, vector<16x32xf32>
    tpu.vector_store %arg14[%c0_67, %c0_68], %185 {strides = array<i32>} : memref<16x32xf32, #tpu.memory_space<vmem>>, vector<16x32xf32>,
    return
  }
  func.func @transform_0(%arg0: i32) -> (i32, i32) {
    %c0_i32 = arith.constant 0 : i32
    %c0_i32_0 = arith.constant 0 : i32
    %c0_i32_1 = arith.constant 0 : i32
    return %c0_i32, %c0_i32_0 : i32, i32
  }
  func.func @transform_1(%arg0: i32) -> (i32, i32) {
    %c0_i32 = arith.constant 0 : i32
    %c0_i32_0 = arith.constant 0 : i32
    %c0_i32_1 = arith.constant 0 : i32
    return %c0_i32, %c0_i32_0 : i32, i32
  }
  func.func @transform_2(%arg0: i32) -> (i32, i32) {
    %c0_i32 = arith.constant 0 : i32
    %c0_i32_0 = arith.constant 0 : i32
    %c0_i32_1 = arith.constant 0 : i32
    return %c0_i32, %c0_i32_0 : i32, i32
  }
  func.func @transform_3(%arg0: i32) -> (i32, i32) {
    %c0_i32 = arith.constant 0 : i32
    %c0_i32_0 = arith.constant 0 : i32
    %c0_i32_1 = arith.constant 0 : i32
    return %c0_i32, %c0_i32_0 : i32, i32
  }
  func.func @transform_4(%arg0: i32) -> (i32, i32) {
    %c0_i32 = arith.constant 0 : i32
    %c0_i32_0 = arith.constant 0 : i32
    %c0_i32_1 = arith.constant 0 : i32
    return %c0_i32, %c0_i32_0 : i32, i32
  }
  func.func @transform_5(%arg0: i32) -> (i32, i32) {
    %c0_i32 = arith.constant 0 : i32
    %c0_i32_0 = arith.constant 0 : i32
    %c0_i32_1 = arith.constant 0 : i32
    return %c0_i32, %c0_i32_0 : i32, i32
  }
  func.func @transform_6(%arg0: i32) -> (i32, i32) {
    %c0_i32 = arith.constant 0 : i32
    %c0_i32_0 = arith.constant 0 : i32
    %c0_i32_1 = arith.constant 0 : i32
    return %c0_i32, %c0_i32_0 : i32, i32
  }
  func.func @transform_7(%arg0: i32) -> (i32, i32) {
    %c0_i32 = arith.constant 0 : i32
    %c0_i32_0 = arith.constant 0 : i32
    %c0_i32_1 = arith.constant 0 : i32
    return %c0_i32, %c0_i32_0 : i32, i32
  }
  func.func @transform_8(%arg0: i32) -> (i32, i32) {
    %c0_i32 = arith.constant 0 : i32
    %c0_i32_0 = arith.constant 0 : i32
    %c0_i32_1 = arith.constant 0 : i32
    return %c0_i32, %c0_i32_0 : i32, i32
  }
  func.func @transform_9(%arg0: i32) -> (i32, i32) {
    %c0_i32 = arith.constant 0 : i32
    %c0_i32_0 = arith.constant 0 : i32
    %c0_i32_1 = arith.constant 0 : i32
    return %c0_i32, %c0_i32_0 : i32, i32
  }
  func.func @transform_10(%arg0: i32) -> (i32, i32) {
    %c0_i32 = arith.constant 0 : i32
    %c0_i32_0 = arith.constant 0 : i32
    %c0_i32_1 = arith.constant 0 : i32
    return %c0_i32, %c0_i32_0 : i32, i32
  }
  func.func @transform_11(%arg0: i32) -> (i32, i32) {
    %c0_i32 = arith.constant 0 : i32
    %c0_i32_0 = arith.constant 0 : i32
    %c0_i32_1 = arith.constant 0 : i32
    return %c0_i32, %c0_i32_0 : i32, i32
  }
  func.func @transform_12(%arg0: i32) -> (i32, i32) {
    %c0_i32 = arith.constant 0 : i32
    %c0_i32_0 = arith.constant 0 : i32
    %c0_i32_1 = arith.constant 0 : i32
    return %c0_i32, %c0_i32_0 : i32, i32
  }
  func.func @transform_13(%arg0: i32) -> (i32, i32) {
    %c0_i32 = arith.constant 0 : i32
    %c0_i32_0 = arith.constant 0 : i32
    %c0_i32_1 = arith.constant 0 : i32
    return %c0_i32, %c0_i32_0 : i32, i32
  }
}

</mosaic_0001>

<llo_original>
// kernel: tpu_custom_call.1
$region0: #{tpu_custom_call.1}
  #allocation0 [shape = 'u32[]', space=smem, size = 0x4, offset = 0x4, fixed_abs, tag = 'smem constant byte address 0x4 - core index']
  #allocation1 [shape = 'u32[144,128]{1,0:T(1,128)}', space=vmem, size = 0x12000, scoped, tag = 'internal scratch']
  %s0 = inlined_call_operand.vmem [shape: f32[16,32], index: 0, kind: input, shape index: {}]
  %s1 = inlined_call_operand.vmem [shape: f32[16,16], index: 1, kind: input, shape index: {}]
  %s2 = inlined_call_operand.vmem [shape: f32[1,32], index: 2, kind: input, shape index: {}]
  %s3 = inlined_call_operand.vmem [shape: f32[1,32], index: 3, kind: input, shape index: {}]
  %s4 = inlined_call_operand.vmem [shape: f32[32,96], index: 4, kind: input, shape index: {}]
  %s5 = inlined_call_operand.vmem [shape: f32[32,32], index: 5, kind: input, shape index: {}]
  %s6 = inlined_call_operand.vmem [shape: f32[1,32], index: 6, kind: input, shape index: {}]
  %s7 = inlined_call_operand.vmem [shape: f32[1,32], index: 7, kind: input, shape index: {}]
  %s8 = inlined_call_operand.vmem [shape: f32[1,32], index: 8, kind: input, shape index: {}]
  %s9 = inlined_call_operand.vmem [shape: f32[32,128], index: 9, kind: input, shape index: {}]
  %s10 = inlined_call_operand.vmem [shape: f32[1,128], index: 10, kind: input, shape index: {}]
  %s11 = inlined_call_operand.vmem [shape: f32[128,32], index: 11, kind: input, shape index: {}]
  %s12 = inlined_call_operand.vmem [shape: f32[1,32], index: 12, kind: input, shape index: {}]
  %s13 = inlined_call_operand.hbm [shape: f32[16,32], index: 13, kind: output, shape index: {}]
  %s14 = sld [smem:[#allocation0]]
  $region62: #{tpu_custom_call.1} parent=0
    _
  %s16 = ssub.s32 1, %s14
  %s17 = scalar_select 0, %s16, %s14
  $region1: #{tpu_custom_call.1} parent=0
    #allocation2 [shape = 'u8[8192]{0}', space=vmem, size = 0x2000, scoped, tag = 'output window, operand 0, single buffered']
    #allocation3 [shape = 's32[1]{0}', space=sflag, size = 0x4, scoped, tag = 'scoped memory for tpu_custom_call.1']
    %18 = vsyncpa [#allocation3], 0
    // Predicated region
    $region2: #{tpu_custom_call.1} parent=1 // pred_check
      _
    $region3: #{tpu_custom_call.1} parent=1 // pred_check_branch
      %20 = sbr.rel (0) target = $region5
    $region4: #{tpu_custom_call.1} parent=1 // pred_region
      _
    $region5: #{tpu_custom_call.1} parent=1 // pred_fallthru
      _
    // Predicated region
    $region6: #{tpu_custom_call.1} parent=1 // pred_check
      _
    $region7: #{tpu_custom_call.1} parent=1 // pred_check_branch
      %22 = sbr.rel (0) target = $region9
    $region8: #{tpu_custom_call.1} parent=1 // pred_region
      _
    $region9: #{tpu_custom_call.1} parent=1 // pred_fallthru
      _
    // Predicated region
    $region10: #{tpu_custom_call.1} parent=1 // pred_check
      _
    $region11: #{tpu_custom_call.1} parent=1 // pred_check_branch
      %24 = sbr.rel (0) target = $region13
    $region12: #{tpu_custom_call.1} parent=1 // pred_region
      _
    $region13: #{tpu_custom_call.1} parent=1 // pred_fallthru
      _
    // Predicated region
    $region14: #{tpu_custom_call.1} parent=1 // pred_check
      _
    $region15: #{tpu_custom_call.1} parent=1 // pred_check_branch
      %26 = sbr.rel (0) target = $region17
    $region16: #{tpu_custom_call.1} parent=1 // pred_region
      _
    $region17: #{tpu_custom_call.1} parent=1 // pred_fallthru
      _
    // Predicated region
    $region18: #{tpu_custom_call.1} parent=1 // pred_check
      _
    $region19: #{tpu_custom_call.1} parent=1 // pred_check_branch
      %28 = sbr.rel (0) target = $region21
    $region20: #{tpu_custom_call.1} parent=1 // pred_region
      _
    $region21: #{tpu_custom_call.1} parent=1 // pred_fallthru
      _
    // Predicated region
    $region22: #{tpu_custom_call.1} parent=1 // pred_check
      _
    $region23: #{tpu_custom_call.1} parent=1 // pred_check_branch
      %30 = sbr.rel (0) target = $region25
    $region24: #{tpu_custom_call.1} parent=1 // pred_region
      _
    $region25: #{tpu_custom_call.1} parent=1 // pred_fallthru
      _
    // Predicated region
    $region26: #{tpu_custom_call.1} parent=1 // pred_check
      _
    $region27: #{tpu_custom_call.1} parent=1 // pred_check_branch
      %32 = sbr.rel (0) target = $region29
    $region28: #{tpu_custom_call.1} parent=1 // pred_region
      _
    $region29: #{tpu_custom_call.1} parent=1 // pred_fallthru
      _
    // Predicated region
    $region30: #{tpu_custom_call.1} parent=1 // pred_check
      _
    $region31: #{tpu_custom_call.1} parent=1 // pred_check_branch
      %34 = sbr.rel (0) target = $region33
    $region32: #{tpu_custom_call.1} parent=1 // pred_region
      _
    $region33: #{tpu_custom_call.1} parent=1 // pred_fallthru
      _
    // Predicated region
    $region34: #{tpu_custom_call.1} parent=1 // pred_check
      _
    $region35: #{tpu_custom_call.1} parent=1 // pred_check_branch
      %36 = sbr.rel (0) target = $region37
    $region36: #{tpu_custom_call.1} parent=1 // pred_region
      _
    $region37: #{tpu_custom_call.1} parent=1 // pred_fallthru
      _
    // Predicated region
    $region38: #{tpu_custom_call.1} parent=1 // pred_check
      _
    $region39: #{tpu_custom_call.1} parent=1 // pred_check_branch
      %38 = sbr.rel (0) target = $region41
    $region40: #{tpu_custom_call.1} parent=1 // pred_region
      _
    $region41: #{tpu_custom_call.1} parent=1 // pred_fallthru
      _
    // Predicated region
    $region42: #{tpu_custom_call.1} parent=1 // pred_check
      _
    $region43: #{tpu_custom_call.1} parent=1 // pred_check_branch
      %40 = sbr.rel (0) target = $region45
    $region44: #{tpu_custom_call.1} parent=1 // pred_region
      _
    $region45: #{tpu_custom_call.1} parent=1 // pred_fallthru
      _
    // Predicated region
    $region46: #{tpu_custom_call.1} parent=1 // pred_check
      _
    $region47: #{tpu_custom_call.1} parent=1 // pred_check_branch
      %42 = sbr.rel (0) target = $region49
    $region48: #{tpu_custom_call.1} parent=1 // pred_region
      _
    $region49: #{tpu_custom_call.1} parent=1 // pred_fallthru
      _
    // Predicated region
    $region50: #{tpu_custom_call.1} parent=1 // pred_check
      _
    $region51: #{tpu_custom_call.1} parent=1 // pred_check_branch
      %44 = sbr.rel (0) target = $region53
    $region52: #{tpu_custom_call.1} parent=1 // pred_region
      _
    $region53: #{tpu_custom_call.1} parent=1 // pred_fallthru
      _
    %v45 = vld [vmem:[%s0] sm:$0xff]
    %v46 = vld [vmem:[%s0 + $0x8] sm:$0xff]
    %v47 = vld [vmem:[%s2] sm:$0x1]
    %v48 = vld [vmem:[%s3] sm:$0x1]
    %vm49 = vcmask 261120
    %v50 = vsel %vm49, %v45, 0.0
    %51 = vadd.xlane.f32.xlu0 %v50
    %v52 = vpop.xlane.xlu0 %51
    %v53 = vsel %vm49, %v46, 0.0
    %54 = vadd.xlane.f32.xlu0 %v53
    %v55 = vpop.xlane.xlu0 %54
    %v56 = vrcp.pop 32.0
    %v57 = vmul.f32 %v52, %v56
    %v58 = vmul.f32 %v55, %v56
    %v59 = vsub.f32 %v45, %v57
    %v60 = vsub.f32 %v46, %v58
    %v61 = vmul.f32 %v59, %v59
    %v62 = vmul.f32 %v60, %v60
    %v63 = vsel %vm49, %v61, 0.0
    %64 = vadd.xlane.f32.xlu0 %v63
    %v65 = vpop.xlane.xlu0 %64
    %v66 = vsel %vm49, %v62, 0.0
    %67 = vadd.xlane.f32.xlu0 %v66
    %v68 = vpop.xlane.xlu0 %67
    %v69 = vmul.f32 %v65, %v56
    %v70 = vmul.f32 %v68, %v56
    %v71 = vadd.f32 %v69, 1e-05
    %v72 = vadd.f32 %v70, 1e-05
    %v73 = vrsqrt.pop %v71
    %v74 = vrsqrt.pop %v72
    %v75 = vmul.f32 %v59, %v73
    %v76 = vmul.f32 %v60, %v74
    %v78 = vlaneseq
    %v79 = vshrl.u32 %v78, 7
    %v80 = vsub.s32 0, %v79
    %v81 = vrot.slane %v47, %v80
    %v83 = vmul.f32 %v75, %v81
    %v84 = vmul.f32 %v76, %v81
    %v86 = vlaneseq
    %v87 = vshrl.u32 %v86, 7
    %v88 = vsub.s32 0, %v87
    %v89 = vrot.slane %v48, %v88
    %v91 = vadd.f32 %v83, %v89
    %v92 = vadd.f32 %v84, %v89
    %v93 = vld [vmem:[%s4] sm:$0xff]
    %v94 = vld [vmem:[%s4 + $0x8] sm:$0xff]
    %v95 = vld [vmem:[%s4 + $0x10] sm:$0xff]
    %v96 = vld [vmem:[%s4 + $0x18] sm:$0xff]
    %v98 = vsel %vm49, %v91, 0
    %v101 = vsel %vm49, %v92, 0
    %103 = vmatprep.subr.mxu0 0.0
    %104 = vmatpush1.msra.mxu0 %v93
    %105 = vmatprep.subr.mxu0 0.0
    %106 = vmatpush1.msra.mxu0 %v94
    %107 = vmatprep.subr.mxu0 0.0
    %108 = vmatpush1.msra.mxu0 %v95
    %109 = vmatprep.subr.mxu0 0.0
    %110 = vmatpush1.msra.mxu0 %v96
    %111 = vmatprep.subr.mxu0 0.0
    %112 = vmatpush1.msra.mxu0 0.0
    %113 = vmatprep.subr.mxu0 0.0
    %114 = vmatpush1.msra.mxu0 0.0
    %115 = vmatprep.subr.mxu0 0.0
    %116 = vmatpush1.msra.mxu0 0.0
    %117 = vmatprep.subr.mxu0 0.0
    %118 = vmatpush1.msra.mxu0 0.0
    %119 = vmatprep.subr.mxu0 0.0
    %120 = vmatpush1.msra.mxu0 0.0
    %121 = vmatprep.subr.mxu0 0.0
    %122 = vmatpush1.msra.mxu0 0.0
    %123 = vmatprep.subr.mxu0 0.0
    %124 = vmatpush1.msra.mxu0 0.0
    %125 = vmatprep.subr.mxu0 0.0
    %126 = vmatpush1.msra.mxu0 0.0
    %127 = vmatprep.subr.mxu0 0.0
    %128 = vmatpush1.msra.mxu0 0.0
    %129 = vmatprep.subr.mxu0 0.0
    %130 = vmatpush1.msra.mxu0 0.0
    %131 = vmatprep.subr.mxu0 0.0
    %132 = vmatpush1.msra.mxu0 0.0
    %133 = vmatprep.subr.mxu0 0.0
    %134 = vmatpush1.msra.mxu0 0.0
    %135 = vmatprep.subr.mxu0 0.0
    %136 = vmatpush1.msra.mxu0 0.0
    %137 = vmatprep.subr.mxu0 0.0
    %138 = vmatpush1.msra.mxu0 0.0
    %139 = vmatprep.subr.mxu0 0.0
    %140 = vmatpush1.msra.mxu0 0.0
    %141 = vmatprep.subr.mxu0 0.0
    %142 = vmatpush1.msra.mxu0 0.0
    %143 = vmatprep.subr.mxu0 0.0
    %144 = vmatpush1.msra.mxu0 0.0
    %145 = vmatprep.subr.mxu0 0.0
    %146 = vmatpush1.msra.mxu0 0.0
    %147 = vmatprep.subr.mxu0 0.0
    %148 = vmatpush1.msra.mxu0 0.0
    %149 = vmatprep.subr.mxu0 0.0
    %150 = vmatpush1.msra.mxu0 0.0
    %151 = vmatprep.subr.mxu0 0.0
    %152 = vmatpush1.msra.mxu0 0.0
    %153 = vmatprep.subr.mxu0 0.0
    %154 = vmatpush1.msra.mxu0 0.0
    %155 = vmatprep.subr.mxu0 0.0
    %156 = vmatpush1.msra.mxu0 0.0
    %157 = vmatprep.subr.mxu0 0.0
    %158 = vmatpush1.msra.mxu0 0.0
    %159 = vmatprep.subr.mxu0 0.0
    %160 = vmatpush1.msra.mxu0 0.0
    %161 = vmatprep.subr.mxu0 0.0
    %162 = vmatpush1.msra.mxu0 0.0
    %163 = vmatprep.subr.mxu0 0.0
    %164 = vmatpush1.msra.mxu0 0.0
    %165 = vmatprep.subr.mxu0 0.0
    %166 = vmatpush1.msra.mxu0 0.0
    %167 = vmatprep.mubr.f32.mxu0 0.0
    %168 = vmatmul.mubr.f32.gmra.mrb[0].mxu0 %v98
    %v169 = vpop.f32.mrb[0].mxu0
    %v170 = vadd.f32 0.0, %v169
    %v171 = vpop.f32.mrb[0].mxu0
    %172 = vmatprep.mubr.f32.mxu0 0.0
    %173 = vmatmul.mubr.f32.gmra.mrb[0].mxu0 %v101
    %v174 = vpop.f32.mrb[0].mxu0
    %v175 = vadd.f32 0.0, %v174
    %v176 = vpop.f32.mrb[0].mxu0
    %177 = vdwg.mxu0
    %v178 = vld [vmem:[%s1] sm:$0xff]
    %v179 = vld [vmem:[%s1 + $0x8] sm:$0xff]
    %182 = vrot.lane.b32.xlu0 %v170, 96
    %v183 = vpop.permute.xlu0 %182
    %184 = vrot.lane.b32.xlu0 %v175, 96
    %v185 = vpop.permute.xlu0 %184
    %vm186 = vcmask 64512
    %v187 = vsel %vm186, %v170, 0
    %v189 = vsel %vm186, %v175, 0
    %v191 = vsel %vm186, %v183, 0
    %v193 = vsel %vm186, %v185, 0
    %195 = vmatprep.subr.mxu0 0.0
    %196 = vmatpush1.xpose.msra.mxu0 %v191
    %197 = vmatprep.subr.mxu0 0.0
    %198 = vmatpush1.xpose.msra.mxu0 %v193
    %199 = vmatprep.subr.mxu0 0.0
    %200 = vmatpush1.xpose.msra.mxu0 0.0
    %201 = vmatprep.subr.mxu0 0.0
    %202 = vmatpush1.xpose.msra.mxu0 0.0
    %203 = vmatprep.subr.mxu0 0.0
    %204 = vmatpush1.xpose.msra.mxu0 0.0
    %205 = vmatprep.subr.mxu0 0.0
    %206 = vmatpush1.xpose.msra.mxu0 0.0
    %207 = vmatprep.subr.mxu0 0.0
    %208 = vmatpush1.xpose.msra.mxu0 0.0
    %209 = vmatprep.subr.mxu0 0.0
    %210 = vmatpush1.xpose.msra.mxu0 0.0
    %211 = vmatprep.subr.mxu0 0.0
    %212 = vmatpush1.xpose.msra.mxu0 0.0
    %213 = vmatprep.subr.mxu0 0.0
    %214 = vmatpush1.xpose.msra.mxu0 0.0
    %215 = vmatprep.subr.mxu0 0.0
    %216 = vmatpush1.xpose.msra.mxu0 0.0
    %217 = vmatprep.subr.mxu0 0.0
    %218 = vmatpush1.xpose.msra.mxu0 0.0
    %219 = vmatprep.subr.mxu0 0.0
    %220 = vmatpush1.xpose.msra.mxu0 0.0
    %221 = vmatprep.subr.mxu0 0.0
    %222 = vmatpush1.xpose.msra.mxu0 0.0
    %223 = vmatprep.subr.mxu0 0.0
    %224 = vmatpush1.xpose.msra.mxu0 0.0
    %225 = vmatprep.subr.mxu0 0.0
    %226 = vmatpush1.xpose.msra.mxu0 0.0
    %227 = vmatprep.subr.mxu0 0.0
    %228 = vmatpush1.xpose.msra.mxu0 0.0
    %229 = vmatprep.subr.mxu0 0.0
    %230 = vmatpush1.xpose.msra.mxu0 0.0
    %231 = vmatprep.subr.mxu0 0.0
    %232 = vmatpush1.xpose.msra.mxu0 0.0
    %233 = vmatprep.subr.mxu0 0.0
    %234 = vmatpush1.xpose.msra.mxu0 0.0
    %235 = vmatprep.subr.mxu0 0.0
    %236 = vmatpush1.xpose.msra.mxu0 0.0
    %237 = vmatprep.subr.mxu0 0.0
    %238 = vmatpush1.xpose.msra.mxu0 0.0
    %239 = vmatprep.subr.mxu0 0.0
    %240 = vmatpush1.xpose.msra.mxu0 0.0
    %241 = vmatprep.subr.mxu0 0.0
    %242 = vmatpush1.xpose.msra.mxu0 0.0
    %243 = vmatprep.subr.mxu0 0.0
    %244 = vmatpush1.xpose.msra.mxu0 0.0
    %245 = vmatprep.subr.mxu0 0.0
    %246 = vmatpush1.xpose.msra.mxu0 0.0
    %247 = vmatprep.subr.mxu0 0.0
    %248 = vmatpush1.xpose.msra.mxu0 0.0
    %249 = vmatprep.subr.mxu0 0.0
    %250 = vmatpush1.xpose.msra.mxu0 0.0
    %251 = vmatprep.subr.mxu0 0.0
    %252 = vmatpush1.xpose.msra.mxu0 0.0
    %253 = vmatprep.subr.mxu0 0.0
    %254 = vmatpush1.xpose.msra.mxu0 0.0
    %255 = vmatprep.subr.mxu0 0.0
    %256 = vmatpush1.xpose.msra.mxu0 0.0
    %257 = vmatprep.subr.mxu0 0.0
    %258 = vmatpush1.xpose.msra.mxu0 0.0
    %259 = vmatprep.mubr.f32.mxu0 0.0
    %260 = vmatmul.mubr.f32.gmra.mrb[0].mxu0 %v187
    %v261 = vpop.f32.mrb[0].mxu0
    %v262 = vadd.f32 0.0, %v261
    %v263 = vpop.f32.mrb[0].mxu0
    %264 = vmatprep.mubr.f32.mxu0 0.0
    %265 = vmatmul.mubr.f32.gmra.mrb[0].mxu0 %v189
    %v266 = vpop.f32.mrb[0].mxu0
    %v267 = vadd.f32 0.0, %v266
    %v268 = vpop.f32.mrb[0].mxu0
    %269 = vdwg.mxu0
    %v270 = vmul.f32 %v262, 0.35355338
    %v271 = vmul.f32 %v267, 0.35355338
    %v272 = vadd.f32 %v270, %v178
    %v273 = vadd.f32 %v271, %v179
    %vm274 = vcmask 130048
    %v275 = vsel %vm274, %v272, -inf
    %276 = vmax.xlane.f32.xlu0 %v275
    %v277 = vpop.xlane.xlu0 %276
    %v278 = vsel %vm274, %v273, -inf
    %279 = vmax.xlane.f32.xlu0 %v278
    %v280 = vpop.xlane.xlu0 %279
    %v281 = vsub.f32 %v272, %v277
    %v282 = vsub.f32 %v273, %v280
    %v283 = vmul.f32 %v281, 1.442695
    %v284 = vpow.pop %v283
    %v285 = vmul.f32 %v282, 1.442695
    %v286 = vpow.pop %v285
    %v287 = vsel %vm274, %v284, 0.0
    %288 = vadd.xlane.f32.xlu0 %v287
    %v289 = vpop.xlane.xlu0 %288
    %v290 = vsel %vm274, %v286, 0.0
    %291 = vadd.xlane.f32.xlu0 %v290
    %v292 = vpop.xlane.xlu0 %291
    %v293 = vrcp.pop %v289
    %v294 = vrcp.pop %v292
    %v295 = vmul.f32 %v284, %v293
    %v296 = vmul.f32 %v286, %v294
    %297 = vrot.lane.b32.xlu0 %v170, 64
    %v298 = vpop.permute.xlu0 %297
    %299 = vrot.lane.b32.xlu0 %v175, 64
    %v300 = vpop.permute.xlu0 %299
    %v304 = vsel %vm274, %v295, 0
    %v307 = vsel %vm274, %v296, 0
    %309 = vmatprep.subr.mxu0 0.0
    %310 = vmatpush1.msra.mxu0 %v298
    %311 = vmatprep.subr.mxu0 0.0
    %312 = vmatpush1.msra.mxu0 %v300
    %313 = vmatprep.subr.mxu0 0.0
    %314 = vmatpush1.msra.mxu0 0.0
    %315 = vmatprep.subr.mxu0 0.0
    %316 = vmatpush1.msra.mxu0 0.0
    %317 = vmatprep.subr.mxu0 0.0
    %318 = vmatpush1.msra.mxu0 0.0
    %319 = vmatprep.subr.mxu0 0.0
    %320 = vmatpush1.msra.mxu0 0.0
    %321 = vmatprep.subr.mxu0 0.0
    %322 = vmatpush1.msra.mxu0 0.0
    %323 = vmatprep.subr.mxu0 0.0
    %324 = vmatpush1.msra.mxu0 0.0
    %325 = vmatprep.subr.mxu0 0.0
    %326 = vmatpush1.msra.mxu0 0.0
    %327 = vmatprep.subr.mxu0 0.0
    %328 = vmatpush1.msra.mxu0 0.0
    %329 = vmatprep.subr.mxu0 0.0
    %330 = vmatpush1.msra.mxu0 0.0
    %331 = vmatprep.subr.mxu0 0.0
    %332 = vmatpush1.msra.mxu0 0.0
    %333 = vmatprep.subr.mxu0 0.0
    %334 = vmatpush1.msra.mxu0 0.0
    %335 = vmatprep.subr.mxu0 0.0
    %336 = vmatpush1.msra.mxu0 0.0
    %337 = vmatprep.subr.mxu0 0.0
    %338 = vmatpush1.msra.mxu0 0.0
    %339 = vmatprep.subr.mxu0 0.0
    %340 = vmatpush1.msra.mxu0 0.0
    %341 = vmatprep.subr.mxu0 0.0
    %342 = vmatpush1.msra.mxu0 0.0
    %343 = vmatprep.subr.mxu0 0.0
    %344 = vmatpush1.msra.mxu0 0.0
    %345 = vmatprep.subr.mxu0 0.0
    %346 = vmatpush1.msra.mxu0 0.0
    %347 = vmatprep.subr.mxu0 0.0
    %348 = vmatpush1.msra.mxu0 0.0
    %349 = vmatprep.subr.mxu0 0.0
    %350 = vmatpush1.msra.mxu0 0.0
    %351 = vmatprep.subr.mxu0 0.0
    %352 = vmatpush1.msra.mxu0 0.0
    %353 = vmatprep.subr.mxu0 0.0
    %354 = vmatpush1.msra.mxu0 0.0
    %355 = vmatprep.subr.mxu0 0.0
    %356 = vmatpush1.msra.mxu0 0.0
    %357 = vmatprep.subr.mxu0 0.0
    %358 = vmatpush1.msra.mxu0 0.0
    %359 = vmatprep.subr.mxu0 0.0
    %360 = vmatpush1.msra.mxu0 0.0
    %361 = vmatprep.subr.mxu0 0.0
    %362 = vmatpush1.msra.mxu0 0.0
    %363 = vmatprep.subr.mxu0 0.0
    %364 = vmatpush1.msra.mxu0 0.0
    %365 = vmatprep.subr.mxu0 0.0
    %366 = vmatpush1.msra.mxu0 0.0
    %367 = vmatprep.subr.mxu0 0.0
    %368 = vmatpush1.msra.mxu0 0.0
    %369 = vmatprep.subr.mxu0 0.0
    %370 = vmatpush1.msra.mxu0 0.0
    %371 = vmatprep.subr.mxu0 0.0
    %372 = vmatpush1.msra.mxu0 0.0
    %373 = vmatprep.mubr.f32.mxu0 0.0
    %374 = vmatmul.mubr.f32.gmra.mrb[0].mxu0 %v304
    %v375 = vpop.f32.mrb[0].mxu0
    %v376 = vadd.f32 0.0, %v375
    %v377 = vpop.f32.mrb[0].mxu0
    %378 = vmatprep.mubr.f32.mxu0 0.0
    %379 = vmatmul.mubr.f32.gmra.mrb[0].mxu0 %v307
    %v380 = vpop.f32.mrb[0].mxu0
    %v381 = vadd.f32 0.0, %v380
    %v382 = vpop.f32.mrb[0].mxu0
    %383 = vdwg.mxu0
    %v384 = vld [vmem:[%s5] sm:$0xff]
    %385 = vrot.lane.b32.xlu0 %v170, 120
    %v386 = vpop.permute.xlu0 %385
    %387 = vrot.lane.b32.xlu0 %v175, 120
    %v388 = vpop.permute.xlu0 %387
    %389 = vrot.lane.b32.xlu0 %v170, 88
    %v390 = vpop.permute.xlu0 %389
    %391 = vrot.lane.b32.xlu0 %v175, 88
    %v392 = vpop.permute.xlu0 %391
    %v393 = vsel %vm186, %v386, 0
    %v395 = vsel %vm186, %v388, 0
    %v397 = vsel %vm186, %v390, 0
    %v399 = vsel %vm186, %v392, 0
    %401 = vmatprep.subr.mxu0 0.0
    %402 = vmatpush1.xpose.msra.mxu0 %v397
    %403 = vmatprep.subr.mxu0 0.0
    %404 = vmatpush1.xpose.msra.mxu0 %v399
    %405 = vmatprep.subr.mxu0 0.0
    %406 = vmatpush1.xpose.msra.mxu0 0.0
    %407 = vmatprep.subr.mxu0 0.0
    %408 = vmatpush1.xpose.msra.mxu0 0.0
    %409 = vmatprep.subr.mxu0 0.0
    %410 = vmatpush1.xpose.msra.mxu0 0.0
    %411 = vmatprep.subr.mxu0 0.0
    %412 = vmatpush1.xpose.msra.mxu0 0.0
    %413 = vmatprep.subr.mxu0 0.0
    %414 = vmatpush1.xpose.msra.mxu0 0.0
    %415 = vmatprep.subr.mxu0 0.0
    %416 = vmatpush1.xpose.msra.mxu0 0.0
    %417 = vmatprep.subr.mxu0 0.0
    %418 = vmatpush1.xpose.msra.mxu0 0.0
    %419 = vmatprep.subr.mxu0 0.0
    %420 = vmatpush1.xpose.msra.mxu0 0.0
    %421 = vmatprep.subr.mxu0 0.0
    %422 = vmatpush1.xpose.msra.mxu0 0.0
    %423 = vmatprep.subr.mxu0 0.0
    %424 = vmatpush1.xpose.msra.mxu0 0.0
    %425 = vmatprep.subr.mxu0 0.0
    %426 = vmatpush1.xpose.msra.mxu0 0.0
    %427 = vmatprep.subr.mxu0 0.0
    %428 = vmatpush1.xpose.msra.mxu0 0.0
    %429 = vmatprep.subr.mxu0 0.0
    %430 = vmatpush1.xpose.msra.mxu0 0.0
    %431 = vmatprep.subr.mxu0 0.0
    %432 = vmatpush1.xpose.msra.mxu0 0.0
    %433 = vmatprep.subr.mxu0 0.0
    %434 = vmatpush1.xpose.msra.mxu0 0.0
    %435 = vmatprep.subr.mxu0 0.0
    %436 = vmatpush1.xpose.msra.mxu0 0.0
    %437 = vmatprep.subr.mxu0 0.0
    %438 = vmatpush1.xpose.msra.mxu0 0.0
    %439 = vmatprep.subr.mxu0 0.0
    %440 = vmatpush1.xpose.msra.mxu0 0.0
    %441 = vmatprep.subr.mxu0 0.0
    %442 = vmatpush1.xpose.msra.mxu0 0.0
    %443 = vmatprep.subr.mxu0 0.0
    %444 = vmatpush1.xpose.msra.mxu0 0.0
    %445 = vmatprep.subr.mxu0 0.0
    %446 = vmatpush1.xpose.msra.mxu0 0.0
    %447 = vmatprep.subr.mxu0 0.0
    %448 = vmatpush1.xpose.msra.mxu0 0.0
    %449 = vmatprep.subr.mxu0 0.0
    %450 = vmatpush1.xpose.msra.mxu0 0.0
    %451 = vmatprep.subr.mxu0 0.0
    %452 = vmatpush1.xpose.msra.mxu0 0.0
    %453 = vmatprep.subr.mxu0 0.0
    %454 = vmatpush1.xpose.msra.mxu0 0.0
    %455 = vmatprep.subr.mxu0 0.0
    %456 = vmatpush1.xpose.msra.mxu0 0.0
    %457 = vmatprep.subr.mxu0 0.0
    %458 = vmatpush1.xpose.msra.mxu0 0.0
    %459 = vmatprep.subr.mxu0 0.0
    %460 = vmatpush1.xpose.msra.mxu0 0.0
    %461 = vmatprep.subr.mxu0 0.0
    %462 = vmatpush1.xpose.msra.mxu0 0.0
    %463 = vmatprep.subr.mxu0 0.0
    %464 = vmatpush1.xpose.msra.mxu0 0.0
    %465 = vmatprep.mubr.f32.mxu0 0.0
    %466 = vmatmul.mubr.f32.gmra.mrb[0].mxu0 %v393
    %v467 = vpop.f32.mrb[0].mxu0
    %v468 = vadd.f32 0.0, %v467
    %v469 = vpop.f32.mrb[0].mxu0
    %470 = vmatprep.mubr.f32.mxu0 0.0
    %471 = vmatmul.mubr.f32.gmra.mrb[0].mxu0 %v395
    %v472 = vpop.f32.mrb[0].mxu0
    %v473 = vadd.f32 0.0, %v472
    %v474 = vpop.f32.mrb[0].mxu0
    %475 = vdwg.mxu0
    %v476 = vmul.f32 %v468, 0.35355338
    %v477 = vmul.f32 %v473, 0.35355338
    %v478 = vadd.f32 %v476, %v178
    %v479 = vadd.f32 %v477, %v179
    %v480 = vsel %vm274, %v478, -inf
    %481 = vmax.xlane.f32.xlu0 %v480
    %v482 = vpop.xlane.xlu0 %481
    %v483 = vsel %vm274, %v479, -inf
    %484 = vmax.xlane.f32.xlu0 %v483
    %v485 = vpop.xlane.xlu0 %484
    %v486 = vsub.f32 %v478, %v482
    %v487 = vsub.f32 %v479, %v485
    %v488 = vmul.f32 %v486, 1.442695
    %v489 = vpow.pop %v488
    %v490 = vmul.f32 %v487, 1.442695
    %v491 = vpow.pop %v490
    %v492 = vsel %vm274, %v489, 0.0
    %493 = vadd.xlane.f32.xlu0 %v492
    %v494 = vpop.xlane.xlu0 %493
    %v495 = vsel %vm274, %v491, 0.0
    %496 = vadd.xlane.f32.xlu0 %v495
    %v497 = vpop.xlane.xlu0 %496
    %v498 = vrcp.pop %v494
    %v499 = vrcp.pop %v497
    %v500 = vmul.f32 %v489, %v498
    %v501 = vmul.f32 %v491, %v499
    %502 = vrot.lane.b32.xlu0 %v170, 56
    %v503 = vpop.permute.xlu0 %502
    %504 = vrot.lane.b32.xlu0 %v175, 56
    %v505 = vpop.permute.xlu0 %504
    %v509 = vsel %vm274, %v500, 0
    %v512 = vsel %vm274, %v501, 0
    %514 = vmatprep.subr.mxu0 0.0
    %515 = vmatpush1.msra.mxu0 %v503
    %516 = vmatprep.subr.mxu0 0.0
    %517 = vmatpush1.msra.mxu0 %v505
    %518 = vmatprep.subr.mxu0 0.0
    %519 = vmatpush1.msra.mxu0 0.0
    %520 = vmatprep.subr.mxu0 0.0
    %521 = vmatpush1.msra.mxu0 0.0
    %522 = vmatprep.subr.mxu0 0.0
    %523 = vmatpush1.msra.mxu0 0.0
    %524 = vmatprep.subr.mxu0 0.0
    %525 = vmatpush1.msra.mxu0 0.0
    %526 = vmatprep.subr.mxu0 0.0
    %527 = vmatpush1.msra.mxu0 0.0
    %528 = vmatprep.subr.mxu0 0.0
    %529 = vmatpush1.msra.mxu0 0.0
    %530 = vmatprep.subr.mxu0 0.0
    %531 = vmatpush1.msra.mxu0 0.0
    %532 = vmatprep.subr.mxu0 0.0
    %533 = vmatpush1.msra.mxu0 0.0
    %534 = vmatprep.subr.mxu0 0.0
    %535 = vmatpush1.msra.mxu0 0.0
    %536 = vmatprep.subr.mxu0 0.0
    %537 = vmatpush1.msra.mxu0 0.0
    %538 = vmatprep.subr.mxu0 0.0
    %539 = vmatpush1.msra.mxu0 0.0
    %540 = vmatprep.subr.mxu0 0.0
    %541 = vmatpush1.msra.mxu0 0.0
    %542 = vmatprep.subr.mxu0 0.0
    %543 = vmatpush1.msra.mxu0 0.0
    %544 = vmatprep.subr.mxu0 0.0
    %545 = vmatpush1.msra.mxu0 0.0
    %546 = vmatprep.subr.mxu0 0.0
    %547 = vmatpush1.msra.mxu0 0.0
    %548 = vmatprep.subr.mxu0 0.0
    %549 = vmatpush1.msra.mxu0 0.0
    %550 = vmatprep.subr.mxu0 0.0
    %551 = vmatpush1.msra.mxu0 0.0
    %552 = vmatprep.subr.mxu0 0.0
    %553 = vmatpush1.msra.mxu0 0.0
    %554 = vmatprep.subr.mxu0 0.0
    %555 = vmatpush1.msra.mxu0 0.0
    %556 = vmatprep.subr.mxu0 0.0
    %557 = vmatpush1.msra.mxu0 0.0
    %558 = vmatprep.subr.mxu0 0.0
    %559 = vmatpush1.msra.mxu0 0.0
    %560 = vmatprep.subr.mxu0 0.0
    %561 = vmatpush1.msra.mxu0 0.0
    %562 = vmatprep.subr.mxu0 0.0
    %563 = vmatpush1.msra.mxu0 0.0
    %564 = vmatprep.subr.mxu0 0.0
    %565 = vmatpush1.msra.mxu0 0.0
    %566 = vmatprep.subr.mxu0 0.0
    %567 = vmatpush1.msra.mxu0 0.0
    %568 = vmatprep.subr.mxu0 0.0
    %569 = vmatpush1.msra.mxu0 0.0
    %570 = vmatprep.subr.mxu0 0.0
    %571 = vmatpush1.msra.mxu0 0.0
    %572 = vmatprep.subr.mxu0 0.0
    %573 = vmatpush1.msra.mxu0 0.0
    %574 = vmatprep.subr.mxu0 0.0
    %575 = vmatpush1.msra.mxu0 0.0
    %576 = vmatprep.subr.mxu0 0.0
    %577 = vmatpush1.msra.mxu0 0.0
    %578 = vmatprep.mubr.f32.mxu0 0.0
    %579 = vmatmul.mubr.f32.gmra.mrb[0].mxu0 %v509
    %v580 = vpop.f32.mrb[0].mxu0
    %v581 = vadd.f32 0.0, %v580
    %v582 = vpop.f32.mrb[0].mxu0
    %583 = vmatprep.mubr.f32.mxu0 0.0
    %584 = vmatmul.mubr.f32.gmra.mrb[0].mxu0 %v512
    %v585 = vpop.f32.mrb[0].mxu0
    %v586 = vadd.f32 0.0, %v585
    %v587 = vpop.f32.mrb[0].mxu0
    %588 = vdwg.mxu0
    %v589 = vld [vmem:[%s5 + $0x8] sm:$0xff]
    %v591 = vsel %vm186, %v581, 0
    %v594 = vsel %vm186, %v586, 0
    %596 = vmatprep.subr.mxu0 0.0
    %597 = vmatpush1.msra.mxu0 %v589
    %598 = vmatprep.subr.mxu0 0.0
    %599 = vmatpush1.msra.mxu0 0.0
    %600 = vmatprep.subr.mxu0 0.0
    %601 = vmatpush1.msra.mxu0 0.0
    %602 = vmatprep.subr.mxu0 0.0
    %603 = vmatpush1.msra.mxu0 0.0
    %604 = vmatprep.subr.mxu0 0.0
    %605 = vmatpush1.msra.mxu0 0.0
    %606 = vmatprep.subr.mxu0 0.0
    %607 = vmatpush1.msra.mxu0 0.0
    %608 = vmatprep.subr.mxu0 0.0
    %609 = vmatpush1.msra.mxu0 0.0
    %610 = vmatprep.subr.mxu0 0.0
    %611 = vmatpush1.msra.mxu0 0.0
    %612 = vmatprep.subr.mxu0 0.0
    %613 = vmatpush1.msra.mxu0 0.0
    %614 = vmatprep.subr.mxu0 0.0
    %615 = vmatpush1.msra.mxu0 0.0
    %616 = vmatprep.subr.mxu0 0.0
    %617 = vmatpush1.msra.mxu0 0.0
    %618 = vmatprep.subr.mxu0 0.0
    %619 = vmatpush1.msra.mxu0 0.0
    %620 = vmatprep.subr.mxu0 0.0
    %621 = vmatpush1.msra.mxu0 0.0
    %622 = vmatprep.subr.mxu0 0.0
    %623 = vmatpush1.msra.mxu0 0.0
    %624 = vmatprep.subr.mxu0 0.0
    %625 = vmatpush1.msra.mxu0 0.0
    %626 = vmatprep.subr.mxu0 0.0
    %627 = vmatpush1.msra.mxu0 0.0
    %628 = vmatprep.subr.mxu0 0.0
    %629 = vmatpush1.msra.mxu0 0.0
    %630 = vmatprep.subr.mxu0 0.0
    %631 = vmatpush1.msra.mxu0 0.0
    %632 = vmatprep.subr.mxu0 0.0
    %633 = vmatpush1.msra.mxu0 0.0
    %634 = vmatprep.subr.mxu0 0.0
    %635 = vmatpush1.msra.mxu0 0.0
    %636 = vmatprep.subr.mxu0 0.0
    %637 = vmatpush1.msra.mxu0 0.0
    %638 = vmatprep.subr.mxu0 0.0
    %639 = vmatpush1.msra.mxu0 0.0
    %640 = vmatprep.subr.mxu0 0.0
    %641 = vmatpush1.msra.mxu0 0.0
    %642 = vmatprep.subr.mxu0 0.0
    %643 = vmatpush1.msra.mxu0 0.0
    %644 = vmatprep.subr.mxu0 0.0
    %645 = vmatpush1.msra.mxu0 0.0
    %646 = vmatprep.subr.mxu0 0.0
    %647 = vmatpush1.msra.mxu0 0.0
    %648 = vmatprep.subr.mxu0 0.0
    %649 = vmatpush1.msra.mxu0 0.0
    %650 = vmatprep.subr.mxu0 0.0
    %651 = vmatpush1.msra.mxu0 0.0
    %652 = vmatprep.subr.mxu0 0.0
    %653 = vmatpush1.msra.mxu0 0.0
    %654 = vmatprep.subr.mxu0 0.0
    %655 = vmatpush1.msra.mxu0 0.0
    %656 = vmatprep.subr.mxu0 0.0
    %657 = vmatpush1.msra.mxu0 0.0
    %658 = vmatprep.subr.mxu0 0.0
    %659 = vmatpush1.msra.mxu0 0.0
    %660 = vmatprep.mubr.f32.mxu0 0.0
    %661 = vmatmul.mubr.f32.gmra.mrb[0].mxu0 %v591
    %v662 = vpop.f32.mrb[0].mxu0
    %v663 = vadd.f32 0.0, %v662
    %v664 = vpop.f32.mrb[0].mxu0
    %665 = vmatprep.mubr.f32.mxu0 0.0
    %666 = vmatmul.mubr.f32.gmra.mrb[0].mxu0 %v594
    %v667 = vpop.f32.mrb[0].mxu0
    %v668 = vadd.f32 0.0, %v667
    %v669 = vpop.f32.mrb[0].mxu0
    %670 = vdwg.mxu0
    %v672 = vsel %vm186, %v376, 0
    %v675 = vsel %vm186, %v381, 0
    %677 = vmatprep.subr.mxu0 0.0
    %678 = vmatpush1.msra.mxu0 %v384
    %679 = vmatprep.subr.mxu0 0.0
    %680 = vmatpush1.msra.mxu0 0.0
    %681 = vmatprep.subr.mxu0 0.0
    %682 = vmatpush1.msra.mxu0 0.0
    %683 = vmatprep.subr.mxu0 0.0
    %684 = vmatpush1.msra.mxu0 0.0
    %685 = vmatprep.subr.mxu0 0.0
    %686 = vmatpush1.msra.mxu0 0.0
    %687 = vmatprep.subr.mxu0 0.0
    %688 = vmatpush1.msra.mxu0 0.0
    %689 = vmatprep.subr.mxu0 0.0
    %690 = vmatpush1.msra.mxu0 0.0
    %691 = vmatprep.subr.mxu0 0.0
    %692 = vmatpush1.msra.mxu0 0.0
    %693 = vmatprep.subr.mxu0 0.0
    %694 = vmatpush1.msra.mxu0 0.0
    %695 = vmatprep.subr.mxu0 0.0
    %696 = vmatpush1.msra.mxu0 0.0
    %697 = vmatprep.subr.mxu0 0.0
    %698 = vmatpush1.msra.mxu0 0.0
    %699 = vmatprep.subr.mxu0 0.0
    %700 = vmatpush1.msra.mxu0 0.0
    %701 = vmatprep.subr.mxu0 0.0
    %702 = vmatpush1.msra.mxu0 0.0
    %703 = vmatprep.subr.mxu0 0.0
    %704 = vmatpush1.msra.mxu0 0.0
    %705 = vmatprep.subr.mxu0 0.0
    %706 = vmatpush1.msra.mxu0 0.0
    %707 = vmatprep.subr.mxu0 0.0
    %708 = vmatpush1.msra.mxu0 0.0
    %709 = vmatprep.subr.mxu0 0.0
    %710 = vmatpush1.msra.mxu0 0.0
    %711 = vmatprep.subr.mxu0 0.0
    %712 = vmatpush1.msra.mxu0 0.0
    %713 = vmatprep.subr.mxu0 0.0
    %714 = vmatpush1.msra.mxu0 0.0
    %715 = vmatprep.subr.mxu0 0.0
    %716 = vmatpush1.msra.mxu0 0.0
    %717 = vmatprep.subr.mxu0 0.0
    %718 = vmatpush1.msra.mxu0 0.0
    %719 = vmatprep.subr.mxu0 0.0
    %720 = vmatpush1.msra.mxu0 0.0
    %721 = vmatprep.subr.mxu0 0.0
    %722 = vmatpush1.msra.mxu0 0.0
    %723 = vmatprep.subr.mxu0 0.0
    %724 = vmatpush1.msra.mxu0 0.0
    %725 = vmatprep.subr.mxu0 0.0
    %726 = vmatpush1.msra.mxu0 0.0
    %727 = vmatprep.subr.mxu0 0.0
    %728 = vmatpush1.msra.mxu0 0.0
    %729 = vmatprep.subr.mxu0 0.0
    %730 = vmatpush1.msra.mxu0 0.0
    %731 = vmatprep.subr.mxu0 0.0
    %732 = vmatpush1.msra.mxu0 0.0
    %733 = vmatprep.subr.mxu0 0.0
    %734 = vmatpush1.msra.mxu0 0.0
    %735 = vmatprep.subr.mxu0 0.0
    %736 = vmatpush1.msra.mxu0 0.0
    %737 = vmatprep.subr.mxu0 0.0
    %738 = vmatpush1.msra.mxu0 0.0
    %739 = vmatprep.subr.mxu0 0.0
    %740 = vmatpush1.msra.mxu0 0.0
    %741 = vmatprep.mubr.f32.mxu0 0.0
    %742 = vmatmul.mubr.f32.gmra.mrb[0].mxu0 %v672
    %v743 = vpop.f32.mrb[0].mxu0
    %v744 = vadd.f32 %v663, %v743
    %v745 = vpop.f32.mrb[0].mxu0
    %746 = vmatprep.mubr.f32.mxu0 0.0
    %747 = vmatmul.mubr.f32.gmra.mrb[0].mxu0 %v675
    %v748 = vpop.f32.mrb[0].mxu0
    %v749 = vadd.f32 %v668, %v748
    %v750 = vpop.f32.mrb[0].mxu0
    %751 = vdwg.mxu0
    %752 = vrot.lane.b32.xlu0 %v170, 112
    %v753 = vpop.permute.xlu0 %752
    %754 = vrot.lane.b32.xlu0 %v175, 112
    %v755 = vpop.permute.xlu0 %754
    %756 = vrot.lane.b32.xlu0 %v170, 80
    %v757 = vpop.permute.xlu0 %756
    %758 = vrot.lane.b32.xlu0 %v175, 80
    %v759 = vpop.permute.xlu0 %758
    %v760 = vsel %vm186, %v753, 0
    %v762 = vsel %vm186, %v755, 0
    %v764 = vsel %vm186, %v757, 0
    %v766 = vsel %vm186, %v759, 0
    %768 = vmatprep.subr.mxu0 0.0
    %769 = vmatpush1.xpose.msra.mxu0 %v764
    %770 = vmatprep.subr.mxu0 0.0
    %771 = vmatpush1.xpose.msra.mxu0 %v766
    %772 = vmatprep.subr.mxu0 0.0
    %773 = vmatpush1.xpose.msra.mxu0 0.0
    %774 = vmatprep.subr.mxu0 0.0
    %775 = vmatpush1.xpose.msra.mxu0 0.0
    %776 = vmatprep.subr.mxu0 0.0
    %777 = vmatpush1.xpose.msra.mxu0 0.0
    %778 = vmatprep.subr.mxu0 0.0
    %779 = vmatpush1.xpose.msra.mxu0 0.0
    %780 = vmatprep.subr.mxu0 0.0
    %781 = vmatpush1.xpose.msra.mxu0 0.0
    %782 = vmatprep.subr.mxu0 0.0
    %783 = vmatpush1.xpose.msra.mxu0 0.0
    %784 = vmatprep.subr.mxu0 0.0
    %785 = vmatpush1.xpose.msra.mxu0 0.0
    %786 = vmatprep.subr.mxu0 0.0
    %787 = vmatpush1.xpose.msra.mxu0 0.0
    %788 = vmatprep.subr.mxu0 0.0
    %789 = vmatpush1.xpose.msra.mxu0 0.0
    %790 = vmatprep.subr.mxu0 0.0
    %791 = vmatpush1.xpose.msra.mxu0 0.0
    %792 = vmatprep.subr.mxu0 0.0
    %793 = vmatpush1.xpose.msra.mxu0 0.0
    %794 = vmatprep.subr.mxu0 0.0
    %795 = vmatpush1.xpose.msra.mxu0 0.0
    %796 = vmatprep.subr.mxu0 0.0
    %797 = vmatpush1.xpose.msra.mxu0 0.0
    %798 = vmatprep.subr.mxu0 0.0
    %799 = vmatpush1.xpose.msra.mxu0 0.0
    %800 = vmatprep.subr.mxu0 0.0
    %801 = vmatpush1.xpose.msra.mxu0 0.0
    %802 = vmatprep.subr.mxu0 0.0
    %803 = vmatpush1.xpose.msra.mxu0 0.0
    %804 = vmatprep.subr.mxu0 0.0
    %805 = vmatpush1.xpose.msra.mxu0 0.0
    %806 = vmatprep.subr.mxu0 0.0
    %807 = vmatpush1.xpose.msra.mxu0 0.0
    %808 = vmatprep.subr.mxu0 0.0
    %809 = vmatpush1.xpose.msra.mxu0 0.0
    %810 = vmatprep.subr.mxu0 0.0
    %811 = vmatpush1.xpose.msra.mxu0 0.0
    %812 = vmatprep.subr.mxu0 0.0
    %813 = vmatpush1.xpose.msra.mxu0 0.0
    %814 = vmatprep.subr.mxu0 0.0
    %815 = vmatpush1.xpose.msra.mxu0 0.0
    %816 = vmatprep.subr.mxu0 0.0
    %817 = vmatpush1.xpose.msra.mxu0 0.0
    %818 = vmatprep.subr.mxu0 0.0
    %819 = vmatpush1.xpose.msra.mxu0 0.0
    %820 = vmatprep.subr.mxu0 0.0
    %821 = vmatpush1.xpose.msra.mxu0 0.0
    %822 = vmatprep.subr.mxu0 0.0
    %823 = vmatpush1.xpose.msra.mxu0 0.0
    %824 = vmatprep.subr.mxu0 0.0
    %825 = vmatpush1.xpose.msra.mxu0 0.0
    %826 = vmatprep.subr.mxu0 0.0
    %827 = vmatpush1.xpose.msra.mxu0 0.0
    %828 = vmatprep.subr.mxu0 0.0
    %829 = vmatpush1.xpose.msra.mxu0 0.0
    %830 = vmatprep.subr.mxu0 0.0
    %831 = vmatpush1.xpose.msra.mxu0 0.0
    %832 = vmatprep.mubr.f32.mxu0 0.0
    %833 = vmatmul.mubr.f32.gmra.mrb[0].mxu0 %v760
    %v834 = vpop.f32.mrb[0].mxu0
    %v835 = vadd.f32 0.0, %v834
    %v836 = vpop.f32.mrb[0].mxu0
    %837 = vmatprep.mubr.f32.mxu0 0.0
    %838 = vmatmul.mubr.f32.gmra.mrb[0].mxu0 %v762
    %v839 = vpop.f32.mrb[0].mxu0
    %v840 = vadd.f32 0.0, %v839
    %v841 = vpop.f32.mrb[0].mxu0
    %842 = vdwg.mxu0
    %v843 = vmul.f32 %v835, 0.35355338
    %v844 = vmul.f32 %v840, 0.35355338
    %v845 = vadd.f32 %v843, %v178
    %v846 = vadd.f32 %v844, %v179
    %v847 = vsel %vm274, %v845, -inf
    %848 = vmax.xlane.f32.xlu0 %v847
    %v849 = vpop.xlane.xlu0 %848
    %v850 = vsel %vm274, %v846, -inf
    %851 = vmax.xlane.f32.xlu0 %v850
    %v852 = vpop.xlane.xlu0 %851
    %v853 = vsub.f32 %v845, %v849
    %v854 = vsub.f32 %v846, %v852
    %v855 = vmul.f32 %v853, 1.442695
    %v856 = vpow.pop %v855
    %v857 = vmul.f32 %v854, 1.442695
    %v858 = vpow.pop %v857
    %v859 = vsel %vm274, %v856, 0.0
    %860 = vadd.xlane.f32.xlu0 %v859
    %v861 = vpop.xlane.xlu0 %860
    %v862 = vsel %vm274, %v858, 0.0
    %863 = vadd.xlane.f32.xlu0 %v862
    %v864 = vpop.xlane.xlu0 %863
    %v865 = vrcp.pop %v861
    %v866 = vrcp.pop %v864
    %v867 = vmul.f32 %v856, %v865
    %v868 = vmul.f32 %v858, %v866
    %869 = vrot.lane.b32.xlu0 %v170, 48
    %v870 = vpop.permute.xlu0 %869
    %871 = vrot.lane.b32.xlu0 %v175, 48
    %v872 = vpop.permute.xlu0 %871
    %v876 = vsel %vm274, %v867, 0
    %v879 = vsel %vm274, %v868, 0
    %881 = vmatprep.subr.mxu0 0.0
    %882 = vmatpush1.msra.mxu0 %v870
    %883 = vmatprep.subr.mxu0 0.0
    %884 = vmatpush1.msra.mxu0 %v872
    %885 = vmatprep.subr.mxu0 0.0
    %886 = vmatpush1.msra.mxu0 0.0
    %887 = vmatprep.subr.mxu0 0.0
    %888 = vmatpush1.msra.mxu0 0.0
    %889 = vmatprep.subr.mxu0 0.0
    %890 = vmatpush1.msra.mxu0 0.0
    %891 = vmatprep.subr.mxu0 0.0
    %892 = vmatpush1.msra.mxu0 0.0
    %893 = vmatprep.subr.mxu0 0.0
    %894 = vmatpush1.msra.mxu0 0.0
    %895 = vmatprep.subr.mxu0 0.0
    %896 = vmatpush1.msra.mxu0 0.0
    %897 = vmatprep.subr.mxu0 0.0
    %898 = vmatpush1.msra.mxu0 0.0
    %899 = vmatprep.subr.mxu0 0.0
    %900 = vmatpush1.msra.mxu0 0.0
    %901 = vmatprep.subr.mxu0 0.0
    %902 = vmatpush1.msra.mxu0 0.0
    %903 = vmatprep.subr.mxu0 0.0
    %904 = vmatpush1.msra.mxu0 0.0
    %905 = vmatprep.subr.mxu0 0.0
    %906 = vmatpush1.msra.mxu0 0.0
    %907 = vmatprep.subr.mxu0 0.0
    %908 = vmatpush1.msra.mxu0 0.0
    %909 = vmatprep.subr.mxu0 0.0
    %910 = vmatpush1.msra.mxu0 0.0
    %911 = vmatprep.subr.mxu0 0.0
    %912 = vmatpush1.msra.mxu0 0.0
    %913 = vmatprep.subr.mxu0 0.0
    %914 = vmatpush1.msra.mxu0 0.0
    %915 = vmatprep.subr.mxu0 0.0
    %916 = vmatpush1.msra.mxu0 0.0
    %917 = vmatprep.subr.mxu0 0.0
    %918 = vmatpush1.msra.mxu0 0.0
    %919 = vmatprep.subr.mxu0 0.0
    %920 = vmatpush1.msra.mxu0 0.0
    %921 = vmatprep.subr.mxu0 0.0
    %922 = vmatpush1.msra.mxu0 0.0
    %923 = vmatprep.subr.mxu0 0.0
    %924 = vmatpush1.msra.mxu0 0.0
    %925 = vmatprep.subr.mxu0 0.0
    %926 = vmatpush1.msra.mxu0 0.0
    %927 = vmatprep.subr.mxu0 0.0
    %928 = vmatpush1.msra.mxu0 0.0
    %929 = vmatprep.subr.mxu0 0.0
    %930 = vmatpush1.msra.mxu0 0.0
    %931 = vmatprep.subr.mxu0 0.0
    %932 = vmatpush1.msra.mxu0 0.0
    %933 = vmatprep.subr.mxu0 0.0
    %934 = vmatpush1.msra.mxu0 0.0
    %935 = vmatprep.subr.mxu0 0.0
    %936 = vmatpush1.msra.mxu0 0.0
    %937 = vmatprep.subr.mxu0 0.0
    %938 = vmatpush1.msra.mxu0 0.0
    %939 = vmatprep.subr.mxu0 0.0
    %940 = vmatpush1.msra.mxu0 0.0
    %941 = vmatprep.subr.mxu0 0.0
    %942 = vmatpush1.msra.mxu0 0.0
    %943 = vmatprep.subr.mxu0 0.0
    %944 = vmatpush1.msra.mxu0 0.0
    %945 = vmatprep.mubr.f32.mxu0 0.0
    %946 = vmatmul.mubr.f32.gmra.mrb[0].mxu0 %v876
    %v947 = vpop.f32.mrb[0].mxu0
    %v948 = vadd.f32 0.0, %v947
    %v949 = vpop.f32.mrb[0].mxu0
    %950 = vmatprep.mubr.f32.mxu0 0.0
    %951 = vmatmul.mubr.f32.gmra.mrb[0].mxu0 %v879
    %v952 = vpop.f32.mrb[0].mxu0
    %v953 = vadd.f32 0.0, %v952
    %v954 = vpop.f32.mrb[0].mxu0
    %955 = vdwg.mxu0
    %v956 = vld [vmem:[%s5 + $0x10] sm:$0xff]
    %v958 = vsel %vm186, %v948, 0
    %v961 = vsel %vm186, %v953, 0
    %963 = vmatprep.subr.mxu0 0.0
    %964 = vmatpush1.msra.mxu0 %v956
    %965 = vmatprep.subr.mxu0 0.0
    %966 = vmatpush1.msra.mxu0 0.0
    %967 = vmatprep.subr.mxu0 0.0
    %968 = vmatpush1.msra.mxu0 0.0
    %969 = vmatprep.subr.mxu0 0.0
    %970 = vmatpush1.msra.mxu0 0.0
    %971 = vmatprep.subr.mxu0 0.0
    %972 = vmatpush1.msra.mxu0 0.0
    %973 = vmatprep.subr.mxu0 0.0
    %974 = vmatpush1.msra.mxu0 0.0
    %975 = vmatprep.subr.mxu0 0.0
    %976 = vmatpush1.msra.mxu0 0.0
    %977 = vmatprep.subr.mxu0 0.0
    %978 = vmatpush1.msra.mxu0 0.0
    %979 = vmatprep.subr.mxu0 0.0
    %980 = vmatpush1.msra.mxu0 0.0
    %981 = vmatprep.subr.mxu0 0.0
    %982 = vmatpush1.msra.mxu0 0.0
    %983 = vmatprep.subr.mxu0 0.0
    %984 = vmatpush1.msra.mxu0 0.0
    %985 = vmatprep.subr.mxu0 0.0
    %986 = vmatpush1.msra.mxu0 0.0
    %987 = vmatprep.subr.mxu0 0.0
    %988 = vmatpush1.msra.mxu0 0.0
    %989 = vmatprep.subr.mxu0 0.0
    %990 = vmatpush1.msra.mxu0 0.0
    %991 = vmatprep.subr.mxu0 0.0
    %992 = vmatpush1.msra.mxu0 0.0
    %993 = vmatprep.subr.mxu0 0.0
    %994 = vmatpush1.msra.mxu0 0.0
    %995 = vmatprep.subr.mxu0 0.0
    %996 = vmatpush1.msra.mxu0 0.0
    %997 = vmatprep.subr.mxu0 0.0
    %998 = vmatpush1.msra.mxu0 0.0
    %999 = vmatprep.subr.mxu0 0.0
    %1000 = vmatpush1.msra.mxu0 0.0
    %1001 = vmatprep.subr.mxu0 0.0
    %1002 = vmatpush1.msra.mxu0 0.0
    %1003 = vmatprep.subr.mxu0 0.0
    %1004 = vmatpush1.msra.mxu0 0.0
    %1005 = vmatprep.subr.mxu0 0.0
    %1006 = vmatpush1.msra.mxu0 0.0
    %1007 = vmatprep.subr.mxu0 0.0
    %1008 = vmatpush1.msra.mxu0 0.0
    %1009 = vmatprep.subr.mxu0 0.0
    %1010 = vmatpush1.msra.mxu0 0.0
    %1011 = vmatprep.subr.mxu0 0.0
    %1012 = vmatpush1.msra.mxu0 0.0
    %1013 = vmatprep.subr.mxu0 0.0
    %1014 = vmatpush1.msra.mxu0 0.0
    %1015 = vmatprep.subr.mxu0 0.0
    %1016 = vmatpush1.msra.mxu0 0.0
    %1017 = vmatprep.subr.mxu0 0.0
    %1018 = vmatpush1.msra.mxu0 0.0
    %1019 = vmatprep.subr.mxu0 0.0
    %1020 = vmatpush1.msra.mxu0 0.0
    %1021 = vmatprep.subr.mxu0 0.0
    %1022 = vmatpush1.msra.mxu0 0.0
    %1023 = vmatprep.subr.mxu0 0.0
    %1024 = vmatpush1.msra.mxu0 0.0
    %1025 = vmatprep.subr.mxu0 0.0
    %1026 = vmatpush1.msra.mxu0 0.0
    %1027 = vmatprep.mubr.f32.mxu0 0.0
    %1028 = vmatmul.mubr.f32.gmra.mrb[0].mxu0 %v958
    %v1029 = vpop.f32.mrb[0].mxu0
    %v1030 = vadd.f32 0.0, %v1029
    %v1031 = vpop.f32.mrb[0].mxu0
    %1032 = vmatprep.mubr.f32.mxu0 0.0
    %1033 = vmatmul.mubr.f32.gmra.mrb[0].mxu0 %v961
    %v1034 = vpop.f32.mrb[0].mxu0
    %v1035 = vadd.f32 0.0, %v1034
    %v1036 = vpop.f32.mrb[0].mxu0
    %1037 = vdwg.mxu0
    %v1038 = vadd.f32 %v744, %v1030
    %v1039 = vadd.f32 %v749, %v1035
    %1040 = vrot.lane.b32.xlu0 %v170, 104
    %v1041 = vpop.permute.xlu0 %1040
    %1042 = vrot.lane.b32.xlu0 %v175, 104
    %v1043 = vpop.permute.xlu0 %1042
    %1044 = vrot.lane.b32.xlu0 %v170, 72
    %v1045 = vpop.permute.xlu0 %1044
    %1046 = vrot.lane.b32.xlu0 %v175, 72
    %v1047 = vpop.permute.xlu0 %1046
    %v1048 = vsel %vm186, %v1041, 0
    %v1050 = vsel %vm186, %v1043, 0
    %v1052 = vsel %vm186, %v1045, 0
    %v1054 = vsel %vm186, %v1047, 0
    %1056 = vmatprep.subr.mxu0 0.0
    %1057 = vmatpush1.xpose.msra.mxu0 %v1052
    %1058 = vmatprep.subr.mxu0 0.0
    %1059 = vmatpush1.xpose.msra.mxu0 %v1054
    %1060 = vmatprep.subr.mxu0 0.0
    %1061 = vmatpush1.xpose.msra.mxu0 0.0
    %1062 = vmatprep.subr.mxu0 0.0
    %1063 = vmatpush1.xpose.msra.mxu0 0.0
    %1064 = vmatprep.subr.mxu0 0.0
    %1065 = vmatpush1.xpose.msra.mxu0 0.0
    %1066 = vmatprep.subr.mxu0 0.0
    %1067 = vmatpush1.xpose.msra.mxu0 0.0
    %1068 = vmatprep.subr.mxu0 0.0
    %1069 = vmatpush1.xpose.msra.mxu0 0.0
    %1070 = vmatprep.subr.mxu0 0.0
    %1071 = vmatpush1.xpose.msra.mxu0 0.0
    %1072 = vmatprep.subr.mxu0 0.0
    %1073 = vmatpush1.xpose.msra.mxu0 0.0
    %1074 = vmatprep.subr.mxu0 0.0
    %1075 = vmatpush1.xpose.msra.mxu0 0.0
    %1076 = vmatprep.subr.mxu0 0.0
    %1077 = vmatpush1.xpose.msra.mxu0 0.0
    %1078 = vmatprep.subr.mxu0 0.0
    %1079 = vmatpush1.xpose.msra.mxu0 0.0
    %1080 = vmatprep.subr.mxu0 0.0
    %1081 = vmatpush1.xpose.msra.mxu0 0.0
    %1082 = vmatprep.subr.mxu0 0.0
    %1083 = vmatpush1.xpose.msra.mxu0 0.0
    %1084 = vmatprep.subr.mxu0 0.0
    %1085 = vmatpush1.xpose.msra.mxu0 0.0
    %1086 = vmatprep.subr.mxu0 0.0
    %1087 = vmatpush1.xpose.msra.mxu0 0.0
    %1088 = vmatprep.subr.mxu0 0.0
    %1089 = vmatpush1.xpose.msra.mxu0 0.0
    %1090 = vmatprep.subr.mxu0 0.0
    %1091 = vmatpush1.xpose.msra.mxu0 0.0
    %1092 = vmatprep.subr.mxu0 0.0
    %1093 = vmatpush1.xpose.msra.mxu0 0.0
    %1094 = vmatprep.subr.mxu0 0.0
    %1095 = vmatpush1.xpose.msra.mxu0 0.0
    %1096 = vmatprep.subr.mxu0 0.0
    %1097 = vmatpush1.xpose.msra.mxu0 0.0
    %1098 = vmatprep.subr.mxu0 0.0
    %1099 = vmatpush1.xpose.msra.mxu0 0.0
    %1100 = vmatprep.subr.mxu0 0.0
    %1101 = vmatpush1.xpose.msra.mxu0 0.0
    %1102 = vmatprep.subr.mxu0 0.0
    %1103 = vmatpush1.xpose.msra.mxu0 0.0
    %1104 = vmatprep.subr.mxu0 0.0
    %1105 = vmatpush1.xpose.msra.mxu0 0.0
    %1106 = vmatprep.subr.mxu0 0.0
    %1107 = vmatpush1.xpose.msra.mxu0 0.0
    %1108 = vmatprep.subr.mxu0 0.0
    %1109 = vmatpush1.xpose.msra.mxu0 0.0
    %1110 = vmatprep.subr.mxu0 0.0
    %1111 = vmatpush1.xpose.msra.mxu0 0.0
    %1112 = vmatprep.subr.mxu0 0.0
    %1113 = vmatpush1.xpose.msra.mxu0 0.0
    %1114 = vmatprep.subr.mxu0 0.0
    %1115 = vmatpush1.xpose.msra.mxu0 0.0
    %1116 = vmatprep.subr.mxu0 0.0
    %1117 = vmatpush1.xpose.msra.mxu0 0.0
    %1118 = vmatprep.subr.mxu0 0.0
    %1119 = vmatpush1.xpose.msra.mxu0 0.0
    %1120 = vmatprep.mubr.f32.mxu0 0.0
    %1121 = vmatmul.mubr.f32.gmra.mrb[0].mxu0 %v1048
    %v1122 = vpop.f32.mrb[0].mxu0
    %v1123 = vadd.f32 0.0, %v1122
    %v1124 = vpop.f32.mrb[0].mxu0
    %1125 = vmatprep.mubr.f32.mxu0 0.0
    %1126 = vmatmul.mubr.f32.gmra.mrb[0].mxu0 %v1050
    %v1127 = vpop.f32.mrb[0].mxu0
    %v1128 = vadd.f32 0.0, %v1127
    %v1129 = vpop.f32.mrb[0].mxu0
    %1130 = vdwg.mxu0
    %v1131 = vmul.f32 %v1123, 0.35355338
    %v1132 = vmul.f32 %v1128, 0.35355338
    %v1133 = vadd.f32 %v1131, %v178
    %v1134 = vadd.f32 %v1132, %v179
    %v1135 = vsel %vm274, %v1133, -inf
    %1136 = vmax.xlane.f32.xlu0 %v1135
    %v1137 = vpop.xlane.xlu0 %1136
    %v1138 = vsel %vm274, %v1134, -inf
    %1139 = vmax.xlane.f32.xlu0 %v1138
    %v1140 = vpop.xlane.xlu0 %1139
    %v1141 = vsub.f32 %v1133, %v1137
    %v1142 = vsub.f32 %v1134, %v1140
    %v1143 = vmul.f32 %v1141, 1.442695
    %v1144 = vpow.pop %v1143
    %v1145 = vmul.f32 %v1142, 1.442695
    %v1146 = vpow.pop %v1145
    %v1147 = vsel %vm274, %v1144, 0.0
    %1148 = vadd.xlane.f32.xlu0 %v1147
    %v1149 = vpop.xlane.xlu0 %1148
    %v1150 = vsel %vm274, %v1146, 0.0
    %1151 = vadd.xlane.f32.xlu0 %v1150
    %v1152 = vpop.xlane.xlu0 %1151
    %v1153 = vrcp.pop %v1149
    %v1154 = vrcp.pop %v1152
    %v1155 = vmul.f32 %v1144, %v1153
    %v1156 = vmul.f32 %v1146, %v1154
    %1157 = vrot.lane.b32.xlu0 %v170, 40
    %v1158 = vpop.permute.xlu0 %1157
    %1159 = vrot.lane.b32.xlu0 %v175, 40
    %v1160 = vpop.permute.xlu0 %1159
    %v1164 = vsel %vm274, %v1155, 0
    %v1167 = vsel %vm274, %v1156, 0
    %1169 = vmatprep.subr.mxu0 0.0
    %1170 = vmatpush1.msra.mxu0 %v1158
    %1171 = vmatprep.subr.mxu0 0.0
    %1172 = vmatpush1.msra.mxu0 %v1160
    %1173 = vmatprep.subr.mxu0 0.0
    %1174 = vmatpush1.msra.mxu0 0.0
    %1175 = vmatprep.subr.mxu0 0.0
    %1176 = vmatpush1.msra.mxu0 0.0
    %1177 = vmatprep.subr.mxu0 0.0
    %1178 = vmatpush1.msra.mxu0 0.0
    %1179 = vmatprep.subr.mxu0 0.0
    %1180 = vmatpush1.msra.mxu0 0.0
    %1181 = vmatprep.subr.mxu0 0.0
    %1182 = vmatpush1.msra.mxu0 0.0
    %1183 = vmatprep.subr.mxu0 0.0
    %1184 = vmatpush1.msra.mxu0 0.0
    %1185 = vmatprep.subr.mxu0 0.0
    %1186 = vmatpush1.msra.mxu0 0.0
    %1187 = vmatprep.subr.mxu0 0.0
    %1188 = vmatpush1.msra.mxu0 0.0
    %1189 = vmatprep.subr.mxu0 0.0
    %1190 = vmatpush1.msra.mxu0 0.0
    %1191 = vmatprep.subr.mxu0 0.0
    %1192 = vmatpush1.msra.mxu0 0.0
    %1193 = vmatprep.subr.mxu0 0.0
    %1194 = vmatpush1.msra.mxu0 0.0
    %1195 = vmatprep.subr.mxu0 0.0
    %1196 = vmatpush1.msra.mxu0 0.0
    %1197 = vmatprep.subr.mxu0 0.0
    %1198 = vmatpush1.msra.mxu0 0.0
    %1199 = vmatprep.subr.mxu0 0.0
    %1200 = vmatpush1.msra.mxu0 0.0
    %1201 = vmatprep.subr.mxu0 0.0
    %1202 = vmatpush1.msra.mxu0 0.0
    %1203 = vmatprep.subr.mxu0 0.0
    %1204 = vmatpush1.msra.mxu0 0.0
    %1205 = vmatprep.subr.mxu0 0.0
    %1206 = vmatpush1.msra.mxu0 0.0
    %1207 = vmatprep.subr.mxu0 0.0
    %1208 = vmatpush1.msra.mxu0 0.0
    %1209 = vmatprep.subr.mxu0 0.0
    %1210 = vmatpush1.msra.mxu0 0.0
    %1211 = vmatprep.subr.mxu0 0.0
    %1212 = vmatpush1.msra.mxu0 0.0
    %1213 = vmatprep.subr.mxu0 0.0
    %1214 = vmatpush1.msra.mxu0 0.0
    %1215 = vmatprep.subr.mxu0 0.0
    %1216 = vmatpush1.msra.mxu0 0.0
    %1217 = vmatprep.subr.mxu0 0.0
    %1218 = vmatpush1.msra.mxu0 0.0
    %1219 = vmatprep.subr.mxu0 0.0
    %1220 = vmatpush1.msra.mxu0 0.0
    %1221 = vmatprep.subr.mxu0 0.0
    %1222 = vmatpush1.msra.mxu0 0.0
    %1223 = vmatprep.subr.mxu0 0.0
    %1224 = vmatpush1.msra.mxu0 0.0
    %1225 = vmatprep.subr.mxu0 0.0
    %1226 = vmatpush1.msra.mxu0 0.0
    %1227 = vmatprep.subr.mxu0 0.0
    %1228 = vmatpush1.msra.mxu0 0.0
    %1229 = vmatprep.subr.mxu0 0.0
    %1230 = vmatpush1.msra.mxu0 0.0
    %1231 = vmatprep.subr.mxu0 0.0
    %1232 = vmatpush1.msra.mxu0 0.0
    %1233 = vmatprep.mubr.f32.mxu0 0.0
    %1234 = vmatmul.mubr.f32.gmra.mrb[0].mxu0 %v1164
    %v1235 = vpop.f32.mrb[0].mxu0
    %v1236 = vadd.f32 0.0, %v1235
    %v1237 = vpop.f32.mrb[0].mxu0
    %1238 = vmatprep.mubr.f32.mxu0 0.0
    %1239 = vmatmul.mubr.f32.gmra.mrb[0].mxu0 %v1167
    %v1240 = vpop.f32.mrb[0].mxu0
    %v1241 = vadd.f32 0.0, %v1240
    %v1242 = vpop.f32.mrb[0].mxu0
    %1243 = vdwg.mxu0
    %v1244 = vld [vmem:[%s5 + $0x18] sm:$0xff]
    %v1246 = vsel %vm186, %v1236, 0
    %v1249 = vsel %vm186, %v1241, 0
    %1251 = vmatprep.subr.mxu0 0.0
    %1252 = vmatpush1.msra.mxu0 %v1244
    %1253 = vmatprep.subr.mxu0 0.0
    %1254 = vmatpush1.msra.mxu0 0.0
    %1255 = vmatprep.subr.mxu0 0.0
    %1256 = vmatpush1.msra.mxu0 0.0
    %1257 = vmatprep.subr.mxu0 0.0
    %1258 = vmatpush1.msra.mxu0 0.0
    %1259 = vmatprep.subr.mxu0 0.0
    %1260 = vmatpush1.msra.mxu0 0.0
    %1261 = vmatprep.subr.mxu0 0.0
    %1262 = vmatpush1.msra.mxu0 0.0
    %1263 = vmatprep.subr.mxu0 0.0
    %1264 = vmatpush1.msra.mxu0 0.0
    %1265 = vmatprep.subr.mxu0 0.0
    %1266 = vmatpush1.msra.mxu0 0.0
    %1267 = vmatprep.subr.mxu0 0.0
    %1268 = vmatpush1.msra.mxu0 0.0
    %1269 = vmatprep.subr.mxu0 0.0
    %1270 = vmatpush1.msra.mxu0 0.0
    %1271 = vmatprep.subr.mxu0 0.0
    %1272 = vmatpush1.msra.mxu0 0.0
    %1273 = vmatprep.subr.mxu0 0.0
    %1274 = vmatpush1.msra.mxu0 0.0
    %1275 = vmatprep.subr.mxu0 0.0
    %1276 = vmatpush1.msra.mxu0 0.0
    %1277 = vmatprep.subr.mxu0 0.0
    %1278 = vmatpush1.msra.mxu0 0.0
    %1279 = vmatprep.subr.mxu0 0.0
    %1280 = vmatpush1.msra.mxu0 0.0
    %1281 = vmatprep.subr.mxu0 0.0
    %1282 = vmatpush1.msra.mxu0 0.0
    %1283 = vmatprep.subr.mxu0 0.0
    %1284 = vmatpush1.msra.mxu0 0.0
    %1285 = vmatprep.subr.mxu0 0.0
    %1286 = vmatpush1.msra.mxu0 0.0
    %1287 = vmatprep.subr.mxu0 0.0
    %1288 = vmatpush1.msra.mxu0 0.0
    %1289 = vmatprep.subr.mxu0 0.0
    %1290 = vmatpush1.msra.mxu0 0.0
    %1291 = vmatprep.subr.mxu0 0.0
    %1292 = vmatpush1.msra.mxu0 0.0
    %1293 = vmatprep.subr.mxu0 0.0
    %1294 = vmatpush1.msra.mxu0 0.0
    %1295 = vmatprep.subr.mxu0 0.0
    %1296 = vmatpush1.msra.mxu0 0.0
    %1297 = vmatprep.subr.mxu0 0.0
    %1298 = vmatpush1.msra.mxu0 0.0
    %1299 = vmatprep.subr.mxu0 0.0
    %1300 = vmatpush1.msra.mxu0 0.0
    %1301 = vmatprep.subr.mxu0 0.0
    %1302 = vmatpush1.msra.mxu0 0.0
    %1303 = vmatprep.subr.mxu0 0.0
    %1304 = vmatpush1.msra.mxu0 0.0
    %1305 = vmatprep.subr.mxu0 0.0
    %1306 = vmatpush1.msra.mxu0 0.0
    %1307 = vmatprep.subr.mxu0 0.0
    %1308 = vmatpush1.msra.mxu0 0.0
    %1309 = vmatprep.subr.mxu0 0.0
    %1310 = vmatpush1.msra.mxu0 0.0
    %1311 = vmatprep.subr.mxu0 0.0
    %1312 = vmatpush1.msra.mxu0 0.0
    %1313 = vmatprep.subr.mxu0 0.0
    %1314 = vmatpush1.msra.mxu0 0.0
    %1315 = vmatprep.mubr.f32.mxu0 0.0
    %1316 = vmatmul.mubr.f32.gmra.mrb[0].mxu0 %v1246
    %v1317 = vpop.f32.mrb[0].mxu0
    %v1318 = vadd.f32 0.0, %v1317
    %v1319 = vpop.f32.mrb[0].mxu0
    %1320 = vmatprep.mubr.f32.mxu0 0.0
    %1321 = vmatmul.mubr.f32.gmra.mrb[0].mxu0 %v1249
    %v1322 = vpop.f32.mrb[0].mxu0
    %v1323 = vadd.f32 0.0, %v1322
    %v1324 = vpop.f32.mrb[0].mxu0
    %1325 = vdwg.mxu0
    %v1326 = vadd.f32 %v1038, %v1318
    %v1327 = vadd.f32 %v1039, %v1323
    %v1328 = vld [vmem:[%s6] sm:$0x1]
    %v1330 = vlaneseq
    %v1331 = vshrl.u32 %v1330, 7
    %v1332 = vsub.s32 0, %v1331
    %v1333 = vrot.slane %v1328, %v1332
    %v1335 = vadd.f32 %v1326, %v1333
    %v1336 = vadd.f32 %v1327, %v1333
    %v1337 = vadd.f32 %v45, %v1335
    %v1338 = vadd.f32 %v46, %v1336
    %v1339 = vld [vmem:[%s7] sm:$0x1]
    %v1340 = vld [vmem:[%s8] sm:$0x1]
    %v1341 = vsel %vm49, %v1337, 0.0
    %1342 = vadd.xlane.f32.xlu0 %v1341
    %v1343 = vpop.xlane.xlu0 %1342
    %v1344 = vsel %vm49, %v1338, 0.0
    %1345 = vadd.xlane.f32.xlu0 %v1344
    %v1346 = vpop.xlane.xlu0 %1345
    %v1347 = vmul.f32 %v1343, %v56
    %v1348 = vmul.f32 %v1346, %v56
    %v1349 = vsub.f32 %v1337, %v1347
    %v1350 = vsub.f32 %v1338, %v1348
    %v1351 = vmul.f32 %v1349, %v1349
    %v1352 = vmul.f32 %v1350, %v1350
    %v1353 = vsel %vm49, %v1351, 0.0
    %1354 = vadd.xlane.f32.xlu0 %v1353
    %v1355 = vpop.xlane.xlu0 %1354
    %v1356 = vsel %vm49, %v1352, 0.0
    %1357 = vadd.xlane.f32.xlu0 %v1356
    %v1358 = vpop.xlane.xlu0 %1357
    %v1359 = vmul.f32 %v1355, %v56
    %v1360 = vmul.f32 %v1358, %v56
    %v1361 = vadd.f32 %v1359, 1e-05
    %v1362 = vadd.f32 %v1360, 1e-05
    %v1363 = vrsqrt.pop %v1361
    %v1364 = vrsqrt.pop %v1362
    %v1365 = vmul.f32 %v1349, %v1363
    %v1366 = vmul.f32 %v1350, %v1364
    %v1368 = vlaneseq
    %v1369 = vshrl.u32 %v1368, 7
    %v1370 = vsub.s32 0, %v1369
    %v1371 = vrot.slane %v1339, %v1370
    %v1373 = vmul.f32 %v1365, %v1371
    %v1374 = vmul.f32 %v1366, %v1371
    %v1376 = vlaneseq
    %v1377 = vshrl.u32 %v1376, 7
    %v1378 = vsub.s32 0, %v1377
    %v1379 = vrot.slane %v1340, %v1378
    %v1381 = vadd.f32 %v1373, %v1379
    %v1382 = vadd.f32 %v1374, %v1379
    %v1383 = vld [vmem:[%s9] sm:$0xff]
    %v1384 = vld [vmem:[%s9 + $0x8] sm:$0xff]
    %v1385 = vld [vmem:[%s9 + $0x10] sm:$0xff]
    %v1386 = vld [vmem:[%s9 + $0x18] sm:$0xff]
    %v1387 = vld [vmem:[%s10] sm:$0x1]
    %v1389 = vlaneseq
    %v1390 = vshrl.u32 %v1389, 7
    %v1391 = vsub.s32 0, %v1390
    %v1392 = vrot.slane %v1387, %v1391
    %v1395 = vsel %vm49, %v1381, 0
    %v1398 = vsel %vm49, %v1382, 0
    %1400 = vmatprep.subr.mxu0 0.0
    %1401 = vmatpush1.msra.mxu0 %v1383
    %1402 = vmatprep.subr.mxu0 0.0
    %1403 = vmatpush1.msra.mxu0 %v1384
    %1404 = vmatprep.subr.mxu0 0.0
    %1405 = vmatpush1.msra.mxu0 %v1385
    %1406 = vmatprep.subr.mxu0 0.0
    %1407 = vmatpush1.msra.mxu0 %v1386
    %1408 = vmatprep.subr.mxu0 0.0
    %1409 = vmatpush1.msra.mxu0 0.0
    %1410 = vmatprep.subr.mxu0 0.0
    %1411 = vmatpush1.msra.mxu0 0.0
    %1412 = vmatprep.subr.mxu0 0.0
    %1413 = vmatpush1.msra.mxu0 0.0
    %1414 = vmatprep.subr.mxu0 0.0
    %1415 = vmatpush1.msra.mxu0 0.0
    %1416 = vmatprep.subr.mxu0 0.0
    %1417 = vmatpush1.msra.mxu0 0.0
    %1418 = vmatprep.subr.mxu0 0.0
    %1419 = vmatpush1.msra.mxu0 0.0
    %1420 = vmatprep.subr.mxu0 0.0
    %1421 = vmatpush1.msra.mxu0 0.0
    %1422 = vmatprep.subr.mxu0 0.0
    %1423 = vmatpush1.msra.mxu0 0.0
    %1424 = vmatprep.subr.mxu0 0.0
    %1425 = vmatpush1.msra.mxu0 0.0
    %1426 = vmatprep.subr.mxu0 0.0
    %1427 = vmatpush1.msra.mxu0 0.0
    %1428 = vmatprep.subr.mxu0 0.0
    %1429 = vmatpush1.msra.mxu0 0.0
    %1430 = vmatprep.subr.mxu0 0.0
    %1431 = vmatpush1.msra.mxu0 0.0
    %1432 = vmatprep.subr.mxu0 0.0
    %1433 = vmatpush1.msra.mxu0 0.0
    %1434 = vmatprep.subr.mxu0 0.0
    %1435 = vmatpush1.msra.mxu0 0.0
    %1436 = vmatprep.subr.mxu0 0.0
    %1437 = vmatpush1.msra.mxu0 0.0
    %1438 = vmatprep.subr.mxu0 0.0
    %1439 = vmatpush1.msra.mxu0 0.0
    %1440 = vmatprep.subr.mxu0 0.0
    %1441 = vmatpush1.msra.mxu0 0.0
    %1442 = vmatprep.subr.mxu0 0.0
    %1443 = vmatpush1.msra.mxu0 0.0
    %1444 = vmatprep.subr.mxu0 0.0
    %1445 = vmatpush1.msra.mxu0 0.0
    %1446 = vmatprep.subr.mxu0 0.0
    %1447 = vmatpush1.msra.mxu0 0.0
    %1448 = vmatprep.subr.mxu0 0.0
    %1449 = vmatpush1.msra.mxu0 0.0
    %1450 = vmatprep.subr.mxu0 0.0
    %1451 = vmatpush1.msra.mxu0 0.0
    %1452 = vmatprep.subr.mxu0 0.0
    %1453 = vmatpush1.msra.mxu0 0.0
    %1454 = vmatprep.subr.mxu0 0.0
    %1455 = vmatpush1.msra.mxu0 0.0
    %1456 = vmatprep.subr.mxu0 0.0
    %1457 = vmatpush1.msra.mxu0 0.0
    %1458 = vmatprep.subr.mxu0 0.0
    %1459 = vmatpush1.msra.mxu0 0.0
    %1460 = vmatprep.subr.mxu0 0.0
    %1461 = vmatpush1.msra.mxu0 0.0
    %1462 = vmatprep.subr.mxu0 0.0
    %1463 = vmatpush1.msra.mxu0 0.0
    %1464 = vmatprep.mubr.f32.mxu0 0.0
    %1465 = vmatmul.mubr.f32.gmra.mrb[0].mxu0 %v1395
    %v1466 = vpop.f32.mrb[0].mxu0
    %v1467 = vadd.f32 %v1392, %v1466
    %v1468 = vpop.f32.mrb[0].mxu0
    %1469 = vmatprep.mubr.f32.mxu0 0.0
    %1470 = vmatmul.mubr.f32.gmra.mrb[0].mxu0 %v1398
    %v1471 = vpop.f32.mrb[0].mxu0
    %v1472 = vadd.f32 %v1392, %v1471
    %v1473 = vpop.f32.mrb[0].mxu0
    %1474 = vdwg.mxu0
    %v1475 = vmul.f32 %v1467, 0.5
    %v1476 = vmul.f32 %v1472, 0.5
    %v1477 = vmul.f32 %v1467, 0.044715
    %v1478 = vmul.f32 %v1472, 0.044715
    %v1479 = vmul.f32 %v1477, %v1467
    %v1480 = vmul.f32 %v1478, %v1472
    %v1481 = vmul.f32 %v1479, %v1467
    %v1482 = vmul.f32 %v1480, %v1472
    %v1483 = vadd.f32 %v1467, %v1481
    %v1484 = vadd.f32 %v1472, %v1482
    %v1485 = vmul.f32 %v1483, 0.7978845
    %v1486 = vmul.f32 %v1484, 0.7978845
    %v1487 = vtanh.pop %v1485
    %v1488 = vtanh.pop %v1486
    %v1489 = vadd.f32 %v1487, 1.0
    %v1490 = vadd.f32 %v1488, 1.0
    %v1491 = vmul.f32 %v1475, %v1489
    %v1492 = vmul.f32 %v1476, %v1490
    %v1493 = vld [vmem:[%s11] sm:$0xff]
    %v1494 = vld [vmem:[%s11 + $0x8] sm:$0xff]
    %v1495 = vld [vmem:[%s11 + $0x10] sm:$0xff]
    %v1496 = vld [vmem:[%s11 + $0x18] sm:$0xff]
    %v1497 = vld [vmem:[%s11 + $0x20] sm:$0xff]
    %v1498 = vld [vmem:[%s11 + $0x28] sm:$0xff]
    %v1499 = vld [vmem:[%s11 + $0x30] sm:$0xff]
    %v1500 = vld [vmem:[%s11 + $0x38] sm:$0xff]
    %v1501 = vld [vmem:[%s11 + $0x40] sm:$0xff]
    %v1502 = vld [vmem:[%s11 + $0x48] sm:$0xff]
    %v1503 = vld [vmem:[%s11 + $0x50] sm:$0xff]
    %v1504 = vld [vmem:[%s11 + $0x58] sm:$0xff]
    %v1505 = vld [vmem:[%s11 + $0x60] sm:$0xff]
    %v1506 = vld [vmem:[%s11 + $0x68] sm:$0xff]
    %v1507 = vld [vmem:[%s11 + $0x70] sm:$0xff]
    %v1508 = vld [vmem:[%s11 + $0x78] sm:$0xff]
    %v1509 = vld [vmem:[%s12] sm:$0x1]
    %v1511 = vlaneseq
    %v1512 = vshrl.u32 %v1511, 7
    %v1513 = vsub.s32 0, %v1512
    %v1514 = vrot.slane %v1509, %v1513
    %1516 = vmatprep.subr.mxu0 0.0
    %1517 = vmatpush1.msra.mxu0 %v1493
    %1518 = vmatprep.subr.mxu0 0.0
    %1519 = vmatpush1.msra.mxu0 %v1494
    %1520 = vmatprep.subr.mxu0 0.0
    %1521 = vmatpush1.msra.mxu0 %v1495
    %1522 = vmatprep.subr.mxu0 0.0
    %1523 = vmatpush1.msra.mxu0 %v1496
    %1524 = vmatprep.subr.mxu0 0.0
    %1525 = vmatpush1.msra.mxu0 %v1497
    %1526 = vmatprep.subr.mxu0 0.0
    %1527 = vmatpush1.msra.mxu0 %v1498
    %1528 = vmatprep.subr.mxu0 0.0
    %1529 = vmatpush1.msra.mxu0 %v1499
    %1530 = vmatprep.subr.mxu0 0.0
    %1531 = vmatpush1.msra.mxu0 %v1500
    %1532 = vmatprep.subr.mxu0 0.0
    %1533 = vmatpush1.msra.mxu0 %v1501
    %1534 = vmatprep.subr.mxu0 0.0
    %1535 = vmatpush1.msra.mxu0 %v1502
    %1536 = vmatprep.subr.mxu0 0.0
    %1537 = vmatpush1.msra.mxu0 %v1503
    %1538 = vmatprep.subr.mxu0 0.0
    %1539 = vmatpush1.msra.mxu0 %v1504
    %1540 = vmatprep.subr.mxu0 0.0
    %1541 = vmatpush1.msra.mxu0 %v1505
    %1542 = vmatprep.subr.mxu0 0.0
    %1543 = vmatpush1.msra.mxu0 %v1506
    %1544 = vmatprep.subr.mxu0 0.0
    %1545 = vmatpush1.msra.mxu0 %v1507
    %1546 = vmatprep.subr.mxu0 0.0
    %1547 = vmatpush1.msra.mxu0 %v1508
    %1548 = vmatprep.subr.mxu0 0.0
    %1549 = vmatpush1.msra.mxu0 0.0
    %1550 = vmatprep.subr.mxu0 0.0
    %1551 = vmatpush1.msra.mxu0 0.0
    %1552 = vmatprep.subr.mxu0 0.0
    %1553 = vmatpush1.msra.mxu0 0.0
    %1554 = vmatprep.subr.mxu0 0.0
    %1555 = vmatpush1.msra.mxu0 0.0
    %1556 = vmatprep.subr.mxu0 0.0
    %1557 = vmatpush1.msra.mxu0 0.0
    %1558 = vmatprep.subr.mxu0 0.0
    %1559 = vmatpush1.msra.mxu0 0.0
    %1560 = vmatprep.subr.mxu0 0.0
    %1561 = vmatpush1.msra.mxu0 0.0
    %1562 = vmatprep.subr.mxu0 0.0
    %1563 = vmatpush1.msra.mxu0 0.0
    %1564 = vmatprep.subr.mxu0 0.0
    %1565 = vmatpush1.msra.mxu0 0.0
    %1566 = vmatprep.subr.mxu0 0.0
    %1567 = vmatpush1.msra.mxu0 0.0
    %1568 = vmatprep.subr.mxu0 0.0
    %1569 = vmatpush1.msra.mxu0 0.0
    %1570 = vmatprep.subr.mxu0 0.0
    %1571 = vmatpush1.msra.mxu0 0.0
    %1572 = vmatprep.subr.mxu0 0.0
    %1573 = vmatpush1.msra.mxu0 0.0
    %1574 = vmatprep.subr.mxu0 0.0
    %1575 = vmatpush1.msra.mxu0 0.0
    %1576 = vmatprep.subr.mxu0 0.0
    %1577 = vmatpush1.msra.mxu0 0.0
    %1578 = vmatprep.subr.mxu0 0.0
    %1579 = vmatpush1.msra.mxu0 0.0
    %1580 = vmatprep.mubr.f32.mxu0 0.0
    %1581 = vmatmul.mubr.f32.gmra.mrb[0].mxu0 %v1491
    %v1582 = vpop.f32.mrb[0].mxu0
    %v1583 = vadd.f32 %v1514, %v1582
    %v1584 = vpop.f32.mrb[0].mxu0
    %1585 = vmatprep.mubr.f32.mxu0 0.0
    %1586 = vmatmul.mubr.f32.gmra.mrb[0].mxu0 %v1492
    %v1587 = vpop.f32.mrb[0].mxu0
    %v1588 = vadd.f32 %v1514, %v1587
    %v1589 = vpop.f32.mrb[0].mxu0
    %1590 = vdwg.mxu0
    %v1591 = vadd.f32 %v1337, %v1583
    %v1592 = vadd.f32 %v1338, %v1588
    %1593 = vst.msk [vmem:[#allocation2] sm:$0xff] %vm49, %v1591
    %1594 = vst.msk [vmem:[#allocation2 + $0x8] sm:$0xff] %vm49, %v1592
    // Predicated region
    $region54: #{tpu_custom_call.1} parent=1 // pred_check
      _
    $region55: #{tpu_custom_call.1} parent=1 // pred_check_branch
      %1596 = sbr.rel (0) target = $region57
    $region56: #{tpu_custom_call.1} parent=1 // pred_region
      %s1598 = ssub.s32 256, 256
      %1599 = vsyncadd [#allocation3], %s1598
      %s1600 = sshll.u32 [#allocation2], 4
      %s1601 = int_to_ptr.vmem [resolvable:$true] %s1600
      %1606 = dma.vmem_to_hbm [thread:$0]  %s1601, 256, %s13, [#allocation3], 128, 128, 8
    $region57: #{tpu_custom_call.1} parent=1 // pred_fallthru
      _
    // Predicated region
    $region58: #{tpu_custom_call.1} parent=1 // pred_check
      _
    $region59: #{tpu_custom_call.1} parent=1 // pred_check_branch
      %1608 = sbr.rel (0) target = $region61
    $region60: #{tpu_custom_call.1} parent=1 // pred_region
      %1609 = dma.done [#allocation3], 256
    $region61: #{tpu_custom_call.1} parent=1 // pred_fallthru
      _
    %1610 = vsyncpa [#allocation3], 1

</llo_original>
